<compile_context>
chip_gen: v5e
topology: v5e:2x2
jax: 0.10.0
libtpu: 0.0.40
codegen_flags: <defaults>
</compile_context>

<pallas_src>
import functools

import jax
import jax.numpy as jnp
from jax.experimental import pallas as pl
from jax.experimental.pallas import tpu as pltpu


def _self_attn_kernel(x_ref, wqkv_ref, bqkv_ref, o_ref, *, matmul_dtype):
    tb, c, n = x_ref.shape                                    # static block dims

    # Resident fused weights/bias (loaded once per grid step, reused for all tb).
    w = wqkv_ref[...].astype(matmul_dtype)                    # (3C, C)
    bias = bqkv_ref[...]                                      # (3C, 1), f32

    def body(b, carry):
        xb = x_ref[b]                                         # (C, N), channel-major

        # Fused QKV projection (Q rows pre-scaled by 1/sqrt(C)).
        qkv = jnp.dot(w, xb.astype(matmul_dtype),
                      preferred_element_type=jnp.float32) + bias   # (3C, N), f32
        q = qkv[0 * c:1 * c, :]                               # (C, N)
        k = qkv[1 * c:2 * c, :]
        v = qkv[2 * c:3 * c, :]

        # scores[n, m] = sum_c q[c, n] * k[c, m]   (scale already folded into q)
        s = jax.lax.dot_general(
            q.astype(matmul_dtype), k.astype(matmul_dtype),
            (((0,), (0,)), ((), ())),
            preferred_element_type=jnp.float32)               # (N, N), f32

        # Numerically stable softmax over the last dim; math stays f32
        # (v5e has no bf16 VPU/EUP path).
        s = s - jnp.max(s, axis=-1, keepdims=True)
        p = jnp.exp(s)
        p = p * pl.reciprocal(jnp.sum(p, axis=-1, keepdims=True), approx=True)

        # out[c, n] = sum_m v[c, m] * p[n, m]  -> natively (C, N), no transpose.
        ob = jax.lax.dot_general(
            v.astype(matmul_dtype), p.astype(matmul_dtype),
            (((1,), (1,)), ((), ())),
            preferred_element_type=jnp.float32)               # (C, N), f32

        o_ref[b] = ob.astype(o_ref.dtype)
        return carry

    unroll = True if tb <= 4 else 2
    jax.lax.fori_loop(0, tb, body, 0, unroll=unroll)


def _vmem_capacity_bytes():
    try:
        info = pltpu.get_tpu_info()
        cap = getattr(info, "vmem_capacity_bytes", None)
        if cap:
            return int(cap)
    except Exception:
        pass
    return 64 << 20          # conservative fallback: v7x per-TensorCore VMEM


def _pick_tb(B, C, N, block_b, tile_budget_bytes):
    # Double-buffered f32 in/out tiles per batch element.
    bytes_per_b = 4 * (2 * C * N + 2 * C * N)
    # Resident fused weights (double-buffered) + per-batch live intermediates
    # (qkv + scores + p + out, x2 for the unrolled loop bodies).
    fixed = 4 * 2 * (3 * C * C + 3 * C)
    fixed += 4 * 2 * (3 * C * N + 2 * N * N + 2 * C * N)
    tb_cap = max(1, (tile_budget_bytes - fixed) // bytes_per_b)
    tb = max(1, min(block_b, B, tb_cap))
    if B >= 2:
        # >= 2 grid steps so both v7x TensorCores get a "parallel" slice.
        tb = min(tb, (B + 1) // 2)
    while B % tb:            # avoid a padded / wasted last block
        tb -= 1
    return tb


def self_attention_feature(x, wq, bq, wk, bk, wv, bv, *,
                           block_b=64, matmul_dtype=jnp.float32):
    """x: (B, C, N) f32.  Weights (C, C) pre-transposed for x @ W, biases (1, C).

    NOTE (integration contract): torch nn.Linear stores (out, in) and computes
    x @ W^T; import torch weights with a transpose or results will be wrong.
    """
    B, C, N = x.shape

    # Channel-major fused parameters; fold the 1/sqrt(C) softmax scale into Q.
    scale = 1.0 / (float(C) ** 0.5)
    wqkv_cm = jnp.concatenate([wq.T * scale, wk.T, wv.T], axis=0)      # (3C, C)
    bqkv_cm = jnp.concatenate([bq.T * scale, bk.T, bv.T], axis=0)      # (3C, 1)

    # VMEM limits / batch tile size.
    vmem_cap = _vmem_capacity_bytes()
    vmem_limit = int(min(vmem_cap // 2, 96 << 20))   # 64 MiB on v5e/v6e, 32 MiB on v7x
    tb = _pick_tb(B, C, N, block_b, vmem_limit // 2)
    grid = (pl.cdiv(B, tb),)

    flops = 2 * B * N * (3 * C * C + 2 * N * C)      # qkv proj + scores + pv
    cost = pl.CostEstimate(
        flops=flops,
        transcendentals=B * N * N,
        bytes_accessed=4 * (2 * B * C * N + wqkv_cm.size + bqkv_cm.size),
    )

    kernel = functools.partial(_self_attn_kernel, matmul_dtype=matmul_dtype)

    return pl.pallas_call(
        kernel,
        out_shape=jax.ShapeDtypeStruct((B, C, N), x.dtype),
        grid_spec=pltpu.PrefetchScalarGridSpec(
            num_scalar_prefetch=0,
            grid=grid,
            in_specs=[
                pl.BlockSpec((tb, C, N), lambda i: (i, 0, 0)),   # x tile
                pl.BlockSpec((3 * C, C), lambda i: (0, 0)),      # fused Wqkv (resident)
                pl.BlockSpec((3 * C, 1), lambda i: (0, 0)),      # fused bias  (resident)
            ],
            out_specs=pl.BlockSpec((tb, C, N), lambda i: (i, 0, 0)),
        ),
        compiler_params=pltpu.CompilerParams(
            dimension_semantics=("parallel",),
            vmem_limit_bytes=vmem_limit,
        ),
        cost_estimate=cost,
    )(x, wqkv_cm, bqkv_cm)


def _reference(x, wq, bq, wk, bk, wv, bv):
    x_t = jnp.transpose(x, (0, 2, 1))
    q = x_t @ wq + bq
    k = x_t @ wk + bk
    v = x_t @ wv + bv
    s = jnp.einsum("bnc,bmc->bnm", q, k) / jnp.sqrt(jnp.float32(x_t.shape[-1]))
    p = jax.nn.softmax(s, axis=-1)
    return jnp.transpose(jnp.einsum("bnm,bmc->bnc", p, v), (0, 2, 1))


if __name__ == "__main__":
    B, C, N = 8, 32, 64            # batch, input_dim (channels), sequence length

    key = jax.random.PRNGKey(0)
    kx, kq, kk, kv, kbq, kbk, kbv = jax.random.split(key, 7)

    x = jax.random.normal(kx, (B, C, N), dtype=jnp.float32)

    # Deterministic parameter init (nn.Linear-style uniform bound 1/sqrt(C)).
    bound = 1.0 / jnp.sqrt(jnp.float32(C))
    wq = jax.random.uniform(kq, (C, C), jnp.float32, -bound, bound)
    wk = jax.random.uniform(kk, (C, C), jnp.float32, -bound, bound)
    wv = jax.random.uniform(kv, (C, C), jnp.float32, -bound, bound)
    bq = jax.random.uniform(kbq, (1, C), jnp.float32, -bound, bound)
    bk = jax.random.uniform(kbk, (1, C), jnp.float32, -bound, bound)
    bv = jax.random.uniform(kbv, (1, C), jnp.float32, -bound, bound)

    ref = _reference(x, wq, bq, wk, bk, wv, bv)

    # f32 MXU operands: tight check against the f32 reference (approx-reciprocal
    # in the softmax denominator is the only approximation).
    out = self_attention_feature(x, wq, bq, wk, bk, wv, bv,
                                 matmul_dtype=jnp.float32)
    jax.block_until_ready(out)
    assert out.shape == (B, C, N)
    assert jnp.allclose(out, ref, atol=5e-3, rtol=5e-3), \
        float(jnp.max(jnp.abs(out - ref)))

    # bf16 MXU operands (f32 accumulation, f32 softmax): the production path on
    # v6e/v7x; looser tolerance due to operand rounding.
    out_bf16 = self_attention_feature(x, wq, bq, wk, bk, wv, bv,
                                      matmul_dtype=jnp.bfloat16)
    jax.block_until_ready(out_bf16)
    assert jnp.allclose(out_bf16, ref, atol=5e-2, rtol=5e-2), \
        float(jnp.max(jnp.abs(out_bf16 - ref)))

    print("KERNEL_OK")
</pallas_src>

<mosaic_0001>
module attributes {stable_mosaic.version = 11 : i64} {
  func.func @_self_attn_kernel(%arg0: i32, %arg1: memref<4x32x64xf32, #tpu.memory_space<vmem>>, %arg2: memref<96x32xf32, #tpu.memory_space<vmem>>, %arg3: memref<96x1xf32, #tpu.memory_space<vmem>>, %arg4: memref<4x32x64xf32, #tpu.memory_space<vmem>>) attributes {dimension_semantics = [#tpu.dimension_semantics<parallel>], iteration_bounds = array<i64: 2>, scalar_prefetch = 0 : i64, scratch_operands = 0 : i64, tpu.core_type = #tpu.core_type<tc>, window_params = [{transform_indices = @transform_0, window_bounds = array<i64: 4, 32, 64>}, {pipeline_mode = #tpu.pipeline_mode<synchronous>, transform_indices = @transform_1, window_bounds = array<i64: 96, 32>}, {pipeline_mode = #tpu.pipeline_mode<synchronous>, transform_indices = @transform_2, window_bounds = array<i64: 96, 1>}, {transform_indices = @transform_3, window_bounds = array<i64: 4, 32, 64>}]} {
    %c0 = arith.constant 0 : index
    %c0_0 = arith.constant 0 : index
    %0 = vector.load %arg2[%c0, %c0_0] : memref<96x32xf32, #tpu.memory_space<vmem>>, vector<96x32xf32>
    %c0_1 = arith.constant 0 : index
    %c0_2 = arith.constant 0 : index
    %1 = vector.load %arg3[%c0_1, %c0_2] : memref<96x1xf32, #tpu.memory_space<vmem>>, vector<96x1xf32>
    %c0_i32 = arith.constant 0 : i32
    %2 = arith.index_cast %c0_i32 : i32 to index
    %c0_3 = arith.constant 0 : index
    %c0_4 = arith.constant 0 : index
    %3 = vector.load %arg1[%2, %c0_3, %c0_4] : memref<4x32x64xf32, #tpu.memory_space<vmem>>, vector<1x32x64xf32>
    %4 = vector.shape_cast %3 : vector<1x32x64xf32> to vector<32x64xf32>
    %cst = arith.constant dense<0.000000e+00> : vector<96x64xf32>
    %5 = tpu.matmul %0, %4, %cst {dimension_numbers = #tpu.dot_dimension_numbers<[1], [0], [0], [1], [0, 0, 1, 1], [], []>} : vector<96x32xf32>, vector<32x64xf32>, vector<96x64xf32> -> vector<96x64xf32>
    %6 = vector.broadcast %1 : vector<96x1xf32> to vector<96x64xf32>
    %7 = arith.addf %5, %6 : vector<96x64xf32>
    %8 = vector.extract_strided_slice %7 {offsets = [0, 0], sizes = [32, 64], strides = [1, 1]} : vector<96x64xf32> to vector<32x64xf32>
    %9 = vector.extract_strided_slice %7 {offsets = [32, 0], sizes = [32, 64], strides = [1, 1]} : vector<96x64xf32> to vector<32x64xf32>
    %10 = vector.extract_strided_slice %7 {offsets = [64, 0], sizes = [32, 64], strides = [1, 1]} : vector<96x64xf32> to vector<32x64xf32>
    %cst_5 = arith.constant dense<0.000000e+00> : vector<64x64xf32>
    %11 = tpu.matmul %8, %9, %cst_5 {dimension_numbers = #tpu.dot_dimension_numbers<[0], [0], [1], [1], [0, 1, 1, 1], [], []>} : vector<32x64xf32>, vector<32x64xf32>, vector<64x64xf32> -> vector<64x64xf32>
    %cst_6 = arith.constant dense<0xFF800000> : vector<64xf32>
    %12 = vector.multi_reduction <maximumf>, %11, %cst_6 [1] : vector<64x64xf32> to vector<64xf32>
    %13 = vector.shape_cast %12 : vector<64xf32> to vector<64x1xf32>
    %14 = vector.broadcast %13 : vector<64x1xf32> to vector<64x64xf32>
    %15 = arith.subf %11, %14 : vector<64x64xf32>
    %16 = math.exp %15 : vector<64x64xf32>
    %cst_7 = arith.constant dense<0.000000e+00> : vector<64xf32>
    %17 = vector.multi_reduction <add>, %16, %cst_7 [1] : vector<64x64xf32> to vector<64xf32>
    %18 = vector.shape_cast %17 : vector<64xf32> to vector<64x1xf32>
    %19 = tpu.reciprocal %18 {approx = true} : vector<64x1xf32> -> vector<64x1xf32>
    %20 = vector.broadcast %19 : vector<64x1xf32> to vector<64x64xf32>
    %21 = arith.mulf %16, %20 : vector<64x64xf32>
    %cst_8 = arith.constant dense<0.000000e+00> : vector<32x64xf32>
    %22 = tpu.matmul %10, %21, %cst_8 {dimension_numbers = #tpu.dot_dimension_numbers<[1], [1], [0], [0], [0, 0, 1, 0], [], []>} : vector<32x64xf32>, vector<64x64xf32>, vector<32x64xf32> -> vector<32x64xf32>
    %23 = arith.index_cast %c0_i32 : i32 to index
    %c0_9 = arith.constant 0 : index
    %c0_10 = arith.constant 0 : index
    %24 = vector.load %arg4[%23, %c0_9, %c0_10] : memref<4x32x64xf32, #tpu.memory_space<vmem>>, vector<1x32x64xf32>
    %25 = vector.shape_cast %24 : vector<1x32x64xf32> to vector<32x64xf32>
    %26 = vector.shape_cast %22 : vector<32x64xf32> to vector<1x32x64xf32>
    tpu.vector_store %arg4[%23, %c0_9, %c0_10], %26 {strides = array<i32>} : memref<4x32x64xf32, #tpu.memory_space<vmem>>, vector<1x32x64xf32>,
    %c1_i32 = arith.constant 1 : i32
    %27 = arith.index_cast %c1_i32 : i32 to index
    %c0_11 = arith.constant 0 : index
    %c0_12 = arith.constant 0 : index
    %28 = vector.load %arg1[%27, %c0_11, %c0_12] : memref<4x32x64xf32, #tpu.memory_space<vmem>>, vector<1x32x64xf32>
    %29 = vector.shape_cast %28 : vector<1x32x64xf32> to vector<32x64xf32>
    %cst_13 = arith.constant dense<0.000000e+00> : vector<96x64xf32>
    %30 = tpu.matmul %0, %29, %cst_13 {dimension_numbers = #tpu.dot_dimension_numbers<[1], [0], [0], [1], [0, 0, 1, 1], [], []>} : vector<96x32xf32>, vector<32x64xf32>, vector<96x64xf32> -> vector<96x64xf32>
    %31 = vector.broadcast %1 : vector<96x1xf32> to vector<96x64xf32>
    %32 = arith.addf %30, %31 : vector<96x64xf32>
    %33 = vector.extract_strided_slice %32 {offsets = [0, 0], sizes = [32, 64], strides = [1, 1]} : vector<96x64xf32> to vector<32x64xf32>
    %34 = vector.extract_strided_slice %32 {offsets = [32, 0], sizes = [32, 64], strides = [1, 1]} : vector<96x64xf32> to vector<32x64xf32>
    %35 = vector.extract_strided_slice %32 {offsets = [64, 0], sizes = [32, 64], strides = [1, 1]} : vector<96x64xf32> to vector<32x64xf32>
    %cst_14 = arith.constant dense<0.000000e+00> : vector<64x64xf32>
    %36 = tpu.matmul %33, %34, %cst_14 {dimension_numbers = #tpu.dot_dimension_numbers<[0], [0], [1], [1], [0, 1, 1, 1], [], []>} : vector<32x64xf32>, vector<32x64xf32>, vector<64x64xf32> -> vector<64x64xf32>
    %cst_15 = arith.constant dense<0xFF800000> : vector<64xf32>
    %37 = vector.multi_reduction <maximumf>, %36, %cst_15 [1] : vector<64x64xf32> to vector<64xf32>
    %38 = vector.shape_cast %37 : vector<64xf32> to vector<64x1xf32>
    %39 = vector.broadcast %38 : vector<64x1xf32> to vector<64x64xf32>
    %40 = arith.subf %36, %39 : vector<64x64xf32>
    %41 = math.exp %40 : vector<64x64xf32>
    %cst_16 = arith.constant dense<0.000000e+00> : vector<64xf32>
    %42 = vector.multi_reduction <add>, %41, %cst_16 [1] : vector<64x64xf32> to vector<64xf32>
    %43 = vector.shape_cast %42 : vector<64xf32> to vector<64x1xf32>
    %44 = tpu.reciprocal %43 {approx = true} : vector<64x1xf32> -> vector<64x1xf32>
    %45 = vector.broadcast %44 : vector<64x1xf32> to vector<64x64xf32>
    %46 = arith.mulf %41, %45 : vector<64x64xf32>
    %cst_17 = arith.constant dense<0.000000e+00> : vector<32x64xf32>
    %47 = tpu.matmul %35, %46, %cst_17 {dimension_numbers = #tpu.dot_dimension_numbers<[1], [1], [0], [0], [0, 0, 1, 0], [], []>} : vector<32x64xf32>, vector<64x64xf32>, vector<32x64xf32> -> vector<32x64xf32>
    %48 = arith.index_cast %c1_i32 : i32 to index
    %c0_18 = arith.constant 0 : index
    %c0_19 = arith.constant 0 : index
    %49 = vector.load %arg4[%48, %c0_18, %c0_19] : memref<4x32x64xf32, #tpu.memory_space<vmem>>, vector<1x32x64xf32>
    %50 = vector.shape_cast %49 : vector<1x32x64xf32> to vector<32x64xf32>
    %51 = vector.shape_cast %47 : vector<32x64xf32> to vector<1x32x64xf32>
    tpu.vector_store %arg4[%48, %c0_18, %c0_19], %51 {strides = array<i32>} : memref<4x32x64xf32, #tpu.memory_space<vmem>>, vector<1x32x64xf32>,
    %c2_i32 = arith.constant 2 : i32
    %52 = arith.index_cast %c2_i32 : i32 to index
    %c0_20 = arith.constant 0 : index
    %c0_21 = arith.constant 0 : index
    %53 = vector.load %arg1[%52, %c0_20, %c0_21] : memref<4x32x64xf32, #tpu.memory_space<vmem>>, vector<1x32x64xf32>
    %54 = vector.shape_cast %53 : vector<1x32x64xf32> to vector<32x64xf32>
    %cst_22 = arith.constant dense<0.000000e+00> : vector<96x64xf32>
    %55 = tpu.matmul %0, %54, %cst_22 {dimension_numbers = #tpu.dot_dimension_numbers<[1], [0], [0], [1], [0, 0, 1, 1], [], []>} : vector<96x32xf32>, vector<32x64xf32>, vector<96x64xf32> -> vector<96x64xf32>
    %56 = vector.broadcast %1 : vector<96x1xf32> to vector<96x64xf32>
    %57 = arith.addf %55, %56 : vector<96x64xf32>
    %58 = vector.extract_strided_slice %57 {offsets = [0, 0], sizes = [32, 64], strides = [1, 1]} : vector<96x64xf32> to vector<32x64xf32>
    %59 = vector.extract_strided_slice %57 {offsets = [32, 0], sizes = [32, 64], strides = [1, 1]} : vector<96x64xf32> to vector<32x64xf32>
    %60 = vector.extract_strided_slice %57 {offsets = [64, 0], sizes = [32, 64], strides = [1, 1]} : vector<96x64xf32> to vector<32x64xf32>
    %cst_23 = arith.constant dense<0.000000e+00> : vector<64x64xf32>
    %61 = tpu.matmul %58, %59, %cst_23 {dimension_numbers = #tpu.dot_dimension_numbers<[0], [0], [1], [1], [0, 1, 1, 1], [], []>} : vector<32x64xf32>, vector<32x64xf32>, vector<64x64xf32> -> vector<64x64xf32>
    %cst_24 = arith.constant dense<0xFF800000> : vector<64xf32>
    %62 = vector.multi_reduction <maximumf>, %61, %cst_24 [1] : vector<64x64xf32> to vector<64xf32>
    %63 = vector.shape_cast %62 : vector<64xf32> to vector<64x1xf32>
    %64 = vector.broadcast %63 : vector<64x1xf32> to vector<64x64xf32>
    %65 = arith.subf %61, %64 : vector<64x64xf32>
    %66 = math.exp %65 : vector<64x64xf32>
    %cst_25 = arith.constant dense<0.000000e+00> : vector<64xf32>
    %67 = vector.multi_reduction <add>, %66, %cst_25 [1] : vector<64x64xf32> to vector<64xf32>
    %68 = vector.shape_cast %67 : vector<64xf32> to vector<64x1xf32>
    %69 = tpu.reciprocal %68 {approx = true} : vector<64x1xf32> -> vector<64x1xf32>
    %70 = vector.broadcast %69 : vector<64x1xf32> to vector<64x64xf32>
    %71 = arith.mulf %66, %70 : vector<64x64xf32>
    %cst_26 = arith.constant dense<0.000000e+00> : vector<32x64xf32>
    %72 = tpu.matmul %60, %71, %cst_26 {dimension_numbers = #tpu.dot_dimension_numbers<[1], [1], [0], [0], [0, 0, 1, 0], [], []>} : vector<32x64xf32>, vector<64x64xf32>, vector<32x64xf32> -> vector<32x64xf32>
    %73 = arith.index_cast %c2_i32 : i32 to index
    %c0_27 = arith.constant 0 : index
    %c0_28 = arith.constant 0 : index
    %74 = vector.load %arg4[%73, %c0_27, %c0_28] : memref<4x32x64xf32, #tpu.memory_space<vmem>>, vector<1x32x64xf32>
    %75 = vector.shape_cast %74 : vector<1x32x64xf32> to vector<32x64xf32>
    %76 = vector.shape_cast %72 : vector<32x64xf32> to vector<1x32x64xf32>
    tpu.vector_store %arg4[%73, %c0_27, %c0_28], %76 {strides = array<i32>} : memref<4x32x64xf32, #tpu.memory_space<vmem>>, vector<1x32x64xf32>,
    %c3_i32 = arith.constant 3 : i32
    %77 = arith.index_cast %c3_i32 : i32 to index
    %c0_29 = arith.constant 0 : index
    %c0_30 = arith.constant 0 : index
    %78 = vector.load %arg1[%77, %c0_29, %c0_30] : memref<4x32x64xf32, #tpu.memory_space<vmem>>, vector<1x32x64xf32>
    %79 = vector.shape_cast %78 : vector<1x32x64xf32> to vector<32x64xf32>
    %cst_31 = arith.constant dense<0.000000e+00> : vector<96x64xf32>
    %80 = tpu.matmul %0, %79, %cst_31 {dimension_numbers = #tpu.dot_dimension_numbers<[1], [0], [0], [1], [0, 0, 1, 1], [], []>} : vector<96x32xf32>, vector<32x64xf32>, vector<96x64xf32> -> vector<96x64xf32>
    %81 = vector.broadcast %1 : vector<96x1xf32> to vector<96x64xf32>
    %82 = arith.addf %80, %81 : vector<96x64xf32>
    %83 = vector.extract_strided_slice %82 {offsets = [0, 0], sizes = [32, 64], strides = [1, 1]} : vector<96x64xf32> to vector<32x64xf32>
    %84 = vector.extract_strided_slice %82 {offsets = [32, 0], sizes = [32, 64], strides = [1, 1]} : vector<96x64xf32> to vector<32x64xf32>
    %85 = vector.extract_strided_slice %82 {offsets = [64, 0], sizes = [32, 64], strides = [1, 1]} : vector<96x64xf32> to vector<32x64xf32>
    %cst_32 = arith.constant dense<0.000000e+00> : vector<64x64xf32>
    %86 = tpu.matmul %83, %84, %cst_32 {dimension_numbers = #tpu.dot_dimension_numbers<[0], [0], [1], [1], [0, 1, 1, 1], [], []>} : vector<32x64xf32>, vector<32x64xf32>, vector<64x64xf32> -> vector<64x64xf32>
    %cst_33 = arith.constant dense<0xFF800000> : vector<64xf32>
    %87 = vector.multi_reduction <maximumf>, %86, %cst_33 [1] : vector<64x64xf32> to vector<64xf32>
    %88 = vector.shape_cast %87 : vector<64xf32> to vector<64x1xf32>
    %89 = vector.broadcast %88 : vector<64x1xf32> to vector<64x64xf32>
    %90 = arith.subf %86, %89 : vector<64x64xf32>
    %91 = math.exp %90 : vector<64x64xf32>
    %cst_34 = arith.constant dense<0.000000e+00> : vector<64xf32>
    %92 = vector.multi_reduction <add>, %91, %cst_34 [1] : vector<64x64xf32> to vector<64xf32>
    %93 = vector.shape_cast %92 : vector<64xf32> to vector<64x1xf32>
    %94 = tpu.reciprocal %93 {approx = true} : vector<64x1xf32> -> vector<64x1xf32>
    %95 = vector.broadcast %94 : vector<64x1xf32> to vector<64x64xf32>
    %96 = arith.mulf %91, %95 : vector<64x64xf32>
    %cst_35 = arith.constant dense<0.000000e+00> : vector<32x64xf32>
    %97 = tpu.matmul %85, %96, %cst_35 {dimension_numbers = #tpu.dot_dimension_numbers<[1], [1], [0], [0], [0, 0, 1, 0], [], []>} : vector<32x64xf32>, vector<64x64xf32>, vector<32x64xf32> -> vector<32x64xf32>
    %98 = arith.index_cast %c3_i32 : i32 to index
    %c0_36 = arith.constant 0 : index
    %c0_37 = arith.constant 0 : index
    %99 = vector.load %arg4[%98, %c0_36, %c0_37] : memref<4x32x64xf32, #tpu.memory_space<vmem>>, vector<1x32x64xf32>
    %100 = vector.shape_cast %99 : vector<1x32x64xf32> to vector<32x64xf32>
    %101 = vector.shape_cast %97 : vector<32x64xf32> to vector<1x32x64xf32>
    tpu.vector_store %arg4[%98, %c0_36, %c0_37], %101 {strides = array<i32>} : memref<4x32x64xf32, #tpu.memory_space<vmem>>, vector<1x32x64xf32>,
    %c4_i32 = arith.constant 4 : i32
    return
  }
  func.func @transform_0(%arg0: i32) -> (i32, i32, i32) {
    %c0_i32 = arith.constant 0 : i32
    %c0_i32_0 = arith.constant 0 : i32
    %c0_i32_1 = arith.constant 0 : i32
    return %arg0, %c0_i32, %c0_i32_0 : i32, i32, i32
  }
  func.func @transform_1(%arg0: i32) -> (i32, i32) {
    %c0_i32 = arith.constant 0 : i32
    %c0_i32_0 = arith.constant 0 : i32
    %c0_i32_1 = arith.constant 0 : i32
    return %c0_i32, %c0_i32_0 : i32, i32
  }
  func.func @transform_2(%arg0: i32) -> (i32, i32) {
    %c0_i32 = arith.constant 0 : i32
    %c0_i32_0 = arith.constant 0 : i32
    %c0_i32_1 = arith.constant 0 : i32
    return %c0_i32, %c0_i32_0 : i32, i32
  }
  func.func @transform_3(%arg0: i32) -> (i32, i32, i32) {
    %c0_i32 = arith.constant 0 : i32
    %c0_i32_0 = arith.constant 0 : i32
    %c0_i32_1 = arith.constant 0 : i32
    return %arg0, %c0_i32, %c0_i32_0 : i32, i32, i32
  }
}

</mosaic_0001>

<llo_original>
// kernel: tpu_custom_call.1
$region0: #{tpu_custom_call.1}
  #allocation0 [shape = 'u32[]', space=smem, size = 0x4, offset = 0x4, fixed_abs, tag = 'smem constant byte address 0x4 - core index']
  #allocation1 [shape = 'u32[72,128]{1,0:T(1,128)}', space=vmem, size = 0x9000, scoped, tag = 'internal scratch']
  %s0 = inlined_call_operand.hbm [shape: f32[8,32,64], index: 0, kind: input, shape index: {}]
  %s1 = inlined_call_operand.vmem [shape: f32[96,32], index: 1, kind: input, shape index: {}]
  %s2 = inlined_call_operand.vmem [shape: f32[96,1], index: 2, kind: input, shape index: {}]
  %s3 = inlined_call_operand.hbm [shape: f32[8,32,64], index: 3, kind: output, shape index: {}]
  %s4 = sld [smem:[#allocation0]]
  $region49: #{tpu_custom_call.1} parent=0
    _
  %s6 = ssub.s32 1, %s4
  %s7 = scalar_select 0, %s6, %s4
  $region1: #{tpu_custom_call.1} parent=0
    #allocation2 [shape = 'u8[131072]{0}', space=vmem, size = 0x20000, scoped, tag = 'input window, operand 0']
    #allocation3 [shape = 's32[2]{0}', space=sflag, size = 0x8, scoped, tag = 'scoped memory for tpu_custom_call.1']
    #allocation4 [shape = 's32[2]{0}', space=sflag, size = 0x8, scoped, tag = 'scoped memory for tpu_custom_call.1']
    #allocation5 [shape = 'u8[131072]{0}', space=vmem, size = 0x20000, scoped, tag = 'output window, operand 0']
    %8 = vsyncpa [#allocation3], 0
    %s9 = scalar_lea.sflag [#allocation3], 1
    %10 = vsyncpa %s9, 0
    %11 = vsyncpa [#allocation4], 0
    %s12 = scalar_lea.sflag [#allocation4], 1
    %13 = vsyncpa %s12, 0
    loop: start=0, step=1, limit=4
    $region2: #{tpu_custom_call.1} parent=1 // loop_pre_header
      _
    $region3: #{tpu_custom_call.1} parent=1 // loop_header
      %s15 = sphi 0, %s19
      %p16 = scmp.ge.s32.totalorder %s15, 4
      %s25 = sphi 0, %s27
      %s28 = sphi 0, %s25
      %s29 = sphi 0, %s28
      %s45 = sphi 0, %s29
      %s49 = sphi 0, %s49
      %s51 = sphi 0, %s49
      %s52 = sphi 0, %s51
      %s66 = sphi 0, %s52
      %s70 = sphi 0, %s70
      %s72 = sphi 0, %s70
      %s73 = sphi 0, %s72
      %s87 = sphi 0, %s73
      %s93 = sphi 0, %s95
      %s96 = sphi 0, %s93
      %s97 = sphi 0, %s96
      %s113 = sphi 0, %s97
    $region4: #{tpu_custom_call.1} parent=1 // loop_header_branch
      %18 = sbr.rel (%p16) target = $region8
    $region5: #{tpu_custom_call.1} parent=1 // loop_body
      %s20 = ssub.s32 %s15, 1
      %s21 = ssub.s32 %s15, 2
      %s22 = sadd.s32 %s15, 1
      %s23 = ssub.s32 %s15, %s22
      %p24 = scmp.eq.s32.totalorder %s23, 0
      %s26 = sadd.s32 %s25, 1
      %s27 = scalar_select %p24, %s25, %s26
      %p30 = pneg %p24
      %p31 = scmp.eq.s32.totalorder %s15, 1
      %p32 = por %p30, %p31
      %p33 = scmp.ne.s32.totalorder %s25, %s28
      %p34 = scmp.eq.s32.totalorder %s15, 0
      %p35 = por %p33, %p34
      %p36 = scmp.ne.s32.totalorder %s25, %s28
      %p37 = scmp.eq.s32.totalorder %s20, 1
      %p38 = por %p36, %p37
      %p39 = scmp.ne.s32.totalorder %s28, %s29
      %p40 = scmp.eq.s32.totalorder %s20, 0
      %p41 = por %p39, %p40
      %p42 = scmp.ne.s32.totalorder %s28, %s29
      %p43 = scmp.eq.s32.totalorder %s21, 1
      %p44 = por %p42, %p43
      %p46 = scmp.ne.s32.totalorder %s29, %s45
      %p47 = scmp.eq.s32.totalorder %s21, 0
      %p48 = por %p46, %p47
      %s50 = sadd.s32 %s49, 1
      %p53 = scmp.eq.s32.totalorder %s15, 1
      %p54 = scmp.ne.s32.totalorder %s49, %s51
      %p55 = scmp.eq.s32.totalorder %s15, 0
      %p56 = por %p54, %p55
      %p57 = scmp.ne.s32.totalorder %s49, %s51
      %p58 = scmp.eq.s32.totalorder %s20, 1
      %p59 = por %p57, %p58
      %p60 = scmp.ne.s32.totalorder %s51, %s52
      %p61 = scmp.eq.s32.totalorder %s20, 0
      %p62 = por %p60, %p61
      %p63 = scmp.ne.s32.totalorder %s51, %s52
      %p64 = scmp.eq.s32.totalorder %s21, 1
      %p65 = por %p63, %p64
      %p67 = scmp.ne.s32.totalorder %s52, %s66
      %p68 = scmp.eq.s32.totalorder %s21, 0
      %p69 = por %p67, %p68
      %s71 = sadd.s32 %s70, 1
      %p74 = scmp.eq.s32.totalorder %s15, 1
      %p75 = scmp.ne.s32.totalorder %s70, %s72
      %p76 = scmp.eq.s32.totalorder %s15, 0
      %p77 = por %p75, %p76
      %p78 = scmp.ne.s32.totalorder %s70, %s72
      %p79 = scmp.eq.s32.totalorder %s20, 1
      %p80 = por %p78, %p79
      %p81 = scmp.ne.s32.totalorder %s72, %s73
      %p82 = scmp.eq.s32.totalorder %s20, 0
      %p83 = por %p81, %p82
      %p84 = scmp.ne.s32.totalorder %s72, %s73
      %p85 = scmp.eq.s32.totalorder %s21, 1
      %p86 = por %p84, %p85
      %p88 = scmp.ne.s32.totalorder %s73, %s87
      %p89 = scmp.eq.s32.totalorder %s21, 0
      %p90 = por %p88, %p89
      %s91 = ssub.s32 %s15, %s22
      %p92 = scmp.eq.s32.totalorder %s91, 0
      %s94 = sadd.s32 %s93, 1
      %s95 = scalar_select %p92, %s93, %s94
      %p98 = pneg %p92
      %p99 = scmp.eq.s32.totalorder %s15, 1
      %p100 = por %p98, %p99
      %p101 = scmp.ne.s32.totalorder %s93, %s96
      %p102 = scmp.eq.s32.totalorder %s15, 0
      %p103 = por %p101, %p102
      %p104 = scmp.ne.s32.totalorder %s93, %s96
      %p105 = scmp.eq.s32.totalorder %s20, 1
      %p106 = por %p104, %p105
      %p107 = scmp.ne.s32.totalorder %s96, %s97
      %p108 = scmp.eq.s32.totalorder %s20, 0
      %p109 = por %p107, %p108
      %p110 = scmp.ne.s32.totalorder %s96, %s97
      %p111 = scmp.eq.s32.totalorder %s21, 1
      %p112 = por %p110, %p111
      %p114 = scmp.ne.s32.totalorder %s97, %s113
      %p115 = scmp.eq.s32.totalorder %s21, 0
      %p116 = por %p114, %p115
      %p117 = scmp.le.s32.totalorder 1, %s15
      %p118 = scmp.lt.s32.totalorder %s15, 3
      %p119 = pnand %p117, %p118
      %p120 = pneg %p119
      // Predicated region
      $region9: #{tpu_custom_call.1} parent=5 // pred_check
        _
      $region10: #{tpu_custom_call.1} parent=5 // pred_check_branch
        %122 = sbr.rel (%p119) target = $region12
      $region11: #{tpu_custom_call.1} parent=5 // pred_region
        %s123 = ssub.s32 %s15, 1
        // Predicated region
        $region13: #{tpu_custom_call.1} parent=11 // pred_check
          %p124 = pneg %p62
        $region14: #{tpu_custom_call.1} parent=11 // pred_check_branch
          %126 = sbr.rel (%p124) target = $region16
        $region15: #{tpu_custom_call.1} parent=11 // pred_region
          _
        $region16: #{tpu_custom_call.1} parent=11 // pred_fallthru
          _
        // Predicated region
        $region17: #{tpu_custom_call.1} parent=11 // pred_check
          %p127 = pneg %p83
        $region18: #{tpu_custom_call.1} parent=11 // pred_check_branch
          %129 = sbr.rel (%p127) target = $region20
        $region19: #{tpu_custom_call.1} parent=11 // pred_region
          _
        $region20: #{tpu_custom_call.1} parent=11 // pred_fallthru
          _
      $region12: #{tpu_custom_call.1} parent=5 // pred_fallthru
        _
      %p130 = scmp.lt.s32.totalorder %s15, 2
      // Predicated region
      $region21: #{tpu_custom_call.1} parent=5 // pred_check
        %p131 = pneg %p130
      $region22: #{tpu_custom_call.1} parent=5 // pred_check_branch
        %133 = sbr.rel (%p131) target = $region24
      $region23: #{tpu_custom_call.1} parent=5 // pred_region
        // Predicated region
        $region25: #{tpu_custom_call.1} parent=23 // pred_check
          %p134 = pneg %p35
        $region26: #{tpu_custom_call.1} parent=23 // pred_check_branch
          %136 = sbr.rel (%p134) target = $region28
        $region27: #{tpu_custom_call.1} parent=23 // pred_region
          %s137 = sand.u32 %s25, 1
          %s138 = scalar_lea.sflag [#allocation3], %s137
          %s139 = sand.u32 %s25, 1
          %s140 = smul.addr %s139, 128
          %s141 = scalar_lea.vmem [#allocation2], %s140
          %s142 = smul.u32 4, %s15
          %144 = vsyncadd %s138, 0
          %s145 = smul.addr %s142, 4
          %s146 = smul.addr %s145, 8
          %s147 = scalar_lea.hbm %s0, %s146
          %s148 = sshll.u32 %s147, 4
          %s149 = int_to_ptr.hbm [resolvable:$true] %s148
          %s150 = sshll.u32 %s141, 4
          %s151 = int_to_ptr.vmem [resolvable:$true] %s150
          %156 = dma.hbm_to_vmem [thread:$0]  %s149, 2048, %s151, %s138, 128, 128, 8
        $region28: #{tpu_custom_call.1} parent=23 // pred_fallthru
          _
      $region24: #{tpu_custom_call.1} parent=5 // pred_fallthru
        _
      %p157 = scmp.le.s32.totalorder 1, %s15
      %p158 = scmp.lt.s32.totalorder %s15, 3
      %p159 = pnand %p157, %p158
      %p160 = pneg %p159
      // Predicated region
      $region29: #{tpu_custom_call.1} parent=5 // pred_check
        _
      $region30: #{tpu_custom_call.1} parent=5 // pred_check_branch
        %162 = sbr.rel (%p159) target = $region32
      $region31: #{tpu_custom_call.1} parent=5 // pred_region
        %s163 = ssub.s32 %s15, 1
        %s164 = sand.u32 %s28, 1
        %s165 = scalar_lea.sflag [#allocation3], %s164
        %s166 = sand.u32 %s28, 1
        %s167 = smul.addr %s166, 128
        %s168 = scalar_lea.vmem [#allocation2], %s167
        // Predicated region
        $region33: #{tpu_custom_call.1} parent=31 // pred_check
          %p169 = pneg %p41
        $region34: #{tpu_custom_call.1} parent=31 // pred_check_branch
          %171 = sbr.rel (%p169) target = $region36
        $region35: #{tpu_custom_call.1} parent=31 // pred_region
          %173 = dma.done %s165, 2048
        $region36: #{tpu_custom_call.1} parent=31 // pred_fallthru
          _
        %s174 = sand.u32 %s28, 1
        %s175 = scalar_lea.sflag [#allocation3], %s174
        %s176 = sand.u32 %s28, 1
        %s177 = smul.addr %s176, 128
        %s178 = scalar_lea.vmem [#allocation2], %s177
        %p179 = pneg %p41
        %p180 = pneg %p38
        %p181 = pneg %p62
        %p182 = pneg %p59
        %p183 = pneg %p83
        %p184 = pneg %p80
        %p185 = pneg %p109
        %p186 = pneg %p106
        %s187 = sand.u32 %s96, 1
        %s188 = scalar_lea.sflag [#allocation4], %s187
        %s189 = sand.u32 %s96, 1
        %s190 = smul.addr %s189, 128
        %s191 = scalar_lea.vmem [#allocation5], %s190
        %s192 = smul.u32 4, %s20
        %s193 = smul.u32 4, %s20
        %v194 = vld [vmem:[%s1] sm:$0xff]
        %v195 = vld [vmem:[%s1 + $0x8] sm:$0xff]
        %v196 = vld [vmem:[%s1 + $0x10] sm:$0xff]
        %v197 = vld [vmem:[%s1 + $0x18] sm:$0xff]
        %v198 = vld [vmem:[%s1 + $0x20] sm:$0xff]
        %v199 = vld [vmem:[%s1 + $0x28] sm:$0xff]
        %v200 = vld [vmem:[%s1 + $0x30] sm:$0xff]
        %v201 = vld [vmem:[%s1 + $0x38] sm:$0xff]
        %v202 = vld [vmem:[%s1 + $0x40] sm:$0xff]
        %v203 = vld [vmem:[%s1 + $0x48] sm:$0xff]
        %v204 = vld [vmem:[%s1 + $0x50] sm:$0xff]
        %v205 = vld [vmem:[%s1 + $0x58] sm:$0xff]
        %v206 = vld [vmem:[%s2] sm:$0xff]
        %v207 = vld [vmem:[%s2 + $0x8] sm:$0xff]
        %v208 = vld [vmem:[%s2 + $0x10] sm:$0xff]
        %v209 = vld [vmem:[%s2 + $0x18] sm:$0xff]
        %v210 = vld [vmem:[%s2 + $0x20] sm:$0xff]
        %v211 = vld [vmem:[%s2 + $0x28] sm:$0xff]
        %v212 = vld [vmem:[%s2 + $0x30] sm:$0xff]
        %v213 = vld [vmem:[%s2 + $0x38] sm:$0xff]
        %v214 = vld [vmem:[%s2 + $0x40] sm:$0xff]
        %v215 = vld [vmem:[%s2 + $0x48] sm:$0xff]
        %v216 = vld [vmem:[%s2 + $0x50] sm:$0xff]
        %v217 = vld [vmem:[%s2 + $0x58] sm:$0xff]
        %v218 = vld [vmem:[%s168] sm:$0xff]
        %v219 = vld [vmem:[%s168 + $0x8] sm:$0xff]
        %v220 = vld [vmem:[%s168 + $0x10] sm:$0xff]
        %v221 = vld [vmem:[%s168 + $0x18] sm:$0xff]
        %223 = vset.pattern.permute.xlu0 0
        %224 = vperm.xlu0 %223, %v206
        %v225 = vpop.permute.xlu0 %224
        %228 = vset.pattern.permute.xlu0 0
        %229 = vperm.xlu0 %228, %v207
        %v230 = vpop.permute.xlu0 %229
        %233 = vset.pattern.permute.xlu0 0
        %234 = vperm.xlu0 %233, %v208
        %v235 = vpop.permute.xlu0 %234
        %238 = vset.pattern.permute.xlu0 0
        %239 = vperm.xlu0 %238, %v209
        %v240 = vpop.permute.xlu0 %239
        %243 = vset.pattern.permute.xlu0 0
        %244 = vperm.xlu0 %243, %v210
        %v245 = vpop.permute.xlu0 %244
        %248 = vset.pattern.permute.xlu0 0
        %249 = vperm.xlu0 %248, %v211
        %v250 = vpop.permute.xlu0 %249
        %253 = vset.pattern.permute.xlu0 0
        %254 = vperm.xlu0 %253, %v212
        %v255 = vpop.permute.xlu0 %254
        %258 = vset.pattern.permute.xlu0 0
        %259 = vperm.xlu0 %258, %v213
        %v260 = vpop.permute.xlu0 %259
        %263 = vset.pattern.permute.xlu0 0
        %264 = vperm.xlu0 %263, %v214
        %v265 = vpop.permute.xlu0 %264
        %268 = vset.pattern.permute.xlu0 0
        %269 = vperm.xlu0 %268, %v215
        %v270 = vpop.permute.xlu0 %269
        %273 = vset.pattern.permute.xlu0 0
        %274 = vperm.xlu0 %273, %v216
        %v275 = vpop.permute.xlu0 %274
        %278 = vset.pattern.permute.xlu0 0
        %279 = vperm.xlu0 %278, %v217
        %v280 = vpop.permute.xlu0 %279
        %vm282 = vcmask 261120
        %v284 = vsel %vm282, %v194, 0
        %v287 = vsel %vm282, %v195, 0
        %v290 = vsel %vm282, %v196, 0
        %v293 = vsel %vm282, %v197, 0
        %v296 = vsel %vm282, %v198, 0
        %v299 = vsel %vm282, %v199, 0
        %v302 = vsel %vm282, %v200, 0
        %v305 = vsel %vm282, %v201, 0
        %v308 = vsel %vm282, %v202, 0
        %v311 = vsel %vm282, %v203, 0
        %v314 = vsel %vm282, %v204, 0
        %v317 = vsel %vm282, %v205, 0
        %319 = vmatpush.msra.mxu0 0.0
        %320 = vmatpush.msra.mxu0 0.0
        %321 = vmatpush.msra.mxu0 0.0
        %322 = vmatpush.msra.mxu0 0.0
        %323 = vmatpush.msra.mxu0 0.0
        %324 = vmatpush.msra.mxu0 0.0
        %325 = vmatpush.msra.mxu0 0.0
        %326 = vmatpush.msra.mxu0 0.0
        %327 = vmatpush.msra.mxu0 0.0
        %328 = vmatpush.msra.mxu0 0.0
        %329 = vmatpush.msra.mxu0 0.0
        %330 = vmatpush.msra.mxu0 0.0
        %331 = vmatpush.msra.mxu0 %v221
        %332 = vmatpush.msra.mxu0 %v220
        %333 = vmatpush.msra.mxu0 %v219
        %334 = vmatpush.msra.mxu0 %v218
        %335 = vmatmul.f32.gmra.mxu0 %v284
        %v336 = vpop.f32.mrf.mxu0
        %v337 = vadd.f32 %v225, %v336
        %338 = vmatmul.f32.gmra.mxu0 %v287
        %v339 = vpop.f32.mrf.mxu0
        %v340 = vadd.f32 %v230, %v339
        %341 = vmatmul.f32.gmra.mxu0 %v290
        %v342 = vpop.f32.mrf.mxu0
        %v343 = vadd.f32 %v235, %v342
        %344 = vmatmul.f32.gmra.mxu0 %v293
        %v345 = vpop.f32.mrf.mxu0
        %v346 = vadd.f32 %v240, %v345
        %347 = vmatmul.f32.gmra.mxu0 %v296
        %v348 = vpop.f32.mrf.mxu0
        %v349 = vadd.f32 %v245, %v348
        %350 = vmatmul.f32.gmra.mxu0 %v299
        %v351 = vpop.f32.mrf.mxu0
        %v352 = vadd.f32 %v250, %v351
        %353 = vmatmul.f32.gmra.mxu0 %v302
        %v354 = vpop.f32.mrf.mxu0
        %v355 = vadd.f32 %v255, %v354
        %356 = vmatmul.f32.gmra.mxu0 %v305
        %v357 = vpop.f32.mrf.mxu0
        %v358 = vadd.f32 %v260, %v357
        %359 = vmatmul.f32.gmra.mxu0 %v308
        %v360 = vpop.f32.mrf.mxu0
        %v361 = vadd.f32 %v265, %v360
        %362 = vmatmul.f32.gmra.mxu0 %v311
        %v363 = vpop.f32.mrf.mxu0
        %v364 = vadd.f32 %v270, %v363
        %365 = vmatmul.f32.gmra.mxu0 %v314
        %v366 = vpop.f32.mrf.mxu0
        %v367 = vadd.f32 %v275, %v366
        %368 = vmatmul.f32.gmra.mxu0 %v317
        %v369 = vpop.f32.mrf.mxu0
        %v370 = vadd.f32 %v280, %v369
        %371 = vdwg.mxu0
        %372 = vxpose.xlu0.b32.start [1/16] %v337, 128
        %373 = vxpose.xlu0.b32.cont [2/16] %v340, 128
        %374 = vxpose.xlu0.b32.cont [3/16] %v343, 128
        %375 = vxpose.xlu0.b32.cont [4/16] %v346, 128
        %376 = vxpose.xlu0.b32.cont [5/16] 0.0, 128
        %377 = vxpose.xlu0.b32.cont [6/16] 0.0, 128
        %378 = vxpose.xlu0.b32.cont [7/16] 0.0, 128
        %379 = vxpose.xlu0.b32.cont [8/16] 0.0, 128
        %380 = vxpose.xlu0.b32.cont [9/16] 0.0, 128
        %381 = vxpose.xlu0.b32.cont [10/16] 0.0, 128
        %382 = vxpose.xlu0.b32.cont [11/16] 0.0, 128
        %383 = vxpose.xlu0.b32.cont [12/16] 0.0, 128
        %384 = vxpose.xlu0.b32.cont [13/16] 0.0, 128
        %385 = vxpose.xlu0.b32.cont [14/16] 0.0, 128
        %386 = vxpose.xlu0.b32.cont [15/16] 0.0, 128
        %387 = vxpose.xlu0.b32.end [16/16] 0.0, 128
        %v388 = vpop.trf.xlu0
        %v389 = vpop.trf.xlu0
        %v390 = vpop.trf.xlu0
        %v391 = vpop.trf.xlu0
        %v392 = vpop.trf.xlu0
        %v393 = vpop.trf.xlu0
        %v394 = vpop.trf.xlu0
        %v395 = vpop.trf.xlu0
        %v396 = vpop.trf.xlu0
        %v397 = vpop.trf.xlu0
        %v398 = vpop.trf.xlu0
        %v399 = vpop.trf.xlu0
        %v400 = vpop.trf.xlu0
        %v401 = vpop.trf.xlu0
        %v402 = vpop.trf.xlu0
        %v403 = vpop.trf.xlu0
        %v405 = vsel %vm282, %v388, 0
        %v408 = vsel %vm282, %v389, 0
        %v411 = vsel %vm282, %v390, 0
        %v414 = vsel %vm282, %v391, 0
        %v417 = vsel %vm282, %v392, 0
        %v420 = vsel %vm282, %v393, 0
        %v423 = vsel %vm282, %v394, 0
        %v426 = vsel %vm282, %v395, 0
        %428 = vmatpush.msra.mxu0 0.0
        %429 = vmatpush.msra.mxu0 0.0
        %430 = vmatpush.msra.mxu0 0.0
        %431 = vmatpush.msra.mxu0 0.0
        %432 = vmatpush.msra.mxu0 0.0
        %433 = vmatpush.msra.mxu0 0.0
        %434 = vmatpush.msra.mxu0 0.0
        %435 = vmatpush.msra.mxu0 0.0
        %436 = vmatpush.msra.mxu0 0.0
        %437 = vmatpush.msra.mxu0 0.0
        %438 = vmatpush.msra.mxu0 0.0
        %439 = vmatpush.msra.mxu0 0.0
        %440 = vmatpush.msra.mxu0 %v358
        %441 = vmatpush.msra.mxu0 %v355
        %442 = vmatpush.msra.mxu0 %v352
        %443 = vmatpush.msra.mxu0 %v349
        %444 = vmatmul.f32.gmra.mxu0 %v405
        %v445 = vpop.f32.mrf.mxu0
        %v446 = vadd.f32 0.0, %v445
        %447 = vmatmul.f32.gmra.mxu0 %v408
        %v448 = vpop.f32.mrf.mxu0
        %v449 = vadd.f32 0.0, %v448
        %450 = vmatmul.f32.gmra.mxu0 %v411
        %v451 = vpop.f32.mrf.mxu0
        %v452 = vadd.f32 0.0, %v451
        %453 = vmatmul.f32.gmra.mxu0 %v414
        %v454 = vpop.f32.mrf.mxu0
        %v455 = vadd.f32 0.0, %v454
        %456 = vmatmul.f32.gmra.mxu0 %v417
        %v457 = vpop.f32.mrf.mxu0
        %v458 = vadd.f32 0.0, %v457
        %459 = vmatmul.f32.gmra.mxu0 %v420
        %v460 = vpop.f32.mrf.mxu0
        %v461 = vadd.f32 0.0, %v460
        %462 = vmatmul.f32.gmra.mxu0 %v423
        %v463 = vpop.f32.mrf.mxu0
        %v464 = vadd.f32 0.0, %v463
        %465 = vmatmul.f32.gmra.mxu0 %v426
        %v466 = vpop.f32.mrf.mxu0
        %v467 = vadd.f32 0.0, %v466
        %468 = vdwg.mxu0
        %vm469 = vcmask 523264
        %v470 = vsel %vm469, %v446, -inf
        %471 = vmax.xlane.f32.xlu0 %v470
        %v472 = vpop.xlane.xlu0 %471
        %v473 = vsel %vm469, %v449, -inf
        %474 = vmax.xlane.f32.xlu0 %v473
        %v475 = vpop.xlane.xlu0 %474
        %v476 = vsel %vm469, %v452, -inf
        %477 = vmax.xlane.f32.xlu0 %v476
        %v478 = vpop.xlane.xlu0 %477
        %v479 = vsel %vm469, %v455, -inf
        %480 = vmax.xlane.f32.xlu0 %v479
        %v481 = vpop.xlane.xlu0 %480
        %v482 = vsel %vm469, %v458, -inf
        %483 = vmax.xlane.f32.xlu0 %v482
        %v484 = vpop.xlane.xlu0 %483
        %v485 = vsel %vm469, %v461, -inf
        %486 = vmax.xlane.f32.xlu0 %v485
        %v487 = vpop.xlane.xlu0 %486
        %v488 = vsel %vm469, %v464, -inf
        %489 = vmax.xlane.f32.xlu0 %v488
        %v490 = vpop.xlane.xlu0 %489
        %v491 = vsel %vm469, %v467, -inf
        %492 = vmax.xlane.f32.xlu0 %v491
        %v493 = vpop.xlane.xlu0 %492
        %v494 = vsub.f32 %v446, %v472
        %v495 = vsub.f32 %v449, %v475
        %v496 = vsub.f32 %v452, %v478
        %v497 = vsub.f32 %v455, %v481
        %v498 = vsub.f32 %v458, %v484
        %v499 = vsub.f32 %v461, %v487
        %v500 = vsub.f32 %v464, %v490
        %v501 = vsub.f32 %v467, %v493
        %v502 = vmul.f32 %v494, 1.442695
        %v503 = vpow.pop %v502
        %v504 = vmul.f32 %v495, 1.442695
        %v505 = vpow.pop %v504
        %v506 = vmul.f32 %v496, 1.442695
        %v507 = vpow.pop %v506
        %v508 = vmul.f32 %v497, 1.442695
        %v509 = vpow.pop %v508
        %v510 = vmul.f32 %v498, 1.442695
        %v511 = vpow.pop %v510
        %v512 = vmul.f32 %v499, 1.442695
        %v513 = vpow.pop %v512
        %v514 = vmul.f32 %v500, 1.442695
        %v515 = vpow.pop %v514
        %v516 = vmul.f32 %v501, 1.442695
        %v517 = vpow.pop %v516
        %v518 = vsel %vm469, %v503, 0.0
        %519 = vadd.xlane.f32.xlu0 %v518
        %v520 = vpop.xlane.xlu0 %519
        %v521 = vsel %vm469, %v505, 0.0
        %522 = vadd.xlane.f32.xlu0 %v521
        %v523 = vpop.xlane.xlu0 %522
        %v524 = vsel %vm469, %v507, 0.0
        %525 = vadd.xlane.f32.xlu0 %v524
        %v526 = vpop.xlane.xlu0 %525
        %v527 = vsel %vm469, %v509, 0.0
        %528 = vadd.xlane.f32.xlu0 %v527
        %v529 = vpop.xlane.xlu0 %528
        %v530 = vsel %vm469, %v511, 0.0
        %531 = vadd.xlane.f32.xlu0 %v530
        %v532 = vpop.xlane.xlu0 %531
        %v533 = vsel %vm469, %v513, 0.0
        %534 = vadd.xlane.f32.xlu0 %v533
        %v535 = vpop.xlane.xlu0 %534
        %v536 = vsel %vm469, %v515, 0.0
        %537 = vadd.xlane.f32.xlu0 %v536
        %v538 = vpop.xlane.xlu0 %537
        %v539 = vsel %vm469, %v517, 0.0
        %540 = vadd.xlane.f32.xlu0 %v539
        %v541 = vpop.xlane.xlu0 %540
        %v542 = vrcp.pop %v520
        %v543 = vrcp.pop %v523
        %v544 = vrcp.pop %v526
        %v545 = vrcp.pop %v529
        %v546 = vrcp.pop %v532
        %v547 = vrcp.pop %v535
        %v548 = vrcp.pop %v538
        %v549 = vrcp.pop %v541
        %v550 = vmul.f32 %v503, %v542
        %v551 = vmul.f32 %v505, %v543
        %v552 = vmul.f32 %v507, %v544
        %v553 = vmul.f32 %v509, %v545
        %v554 = vmul.f32 %v511, %v546
        %v555 = vmul.f32 %v513, %v547
        %v556 = vmul.f32 %v515, %v548
        %v557 = vmul.f32 %v517, %v549
        %v559 = vsel %vm469, %v361, 0
        %v562 = vsel %vm469, %v364, 0
        %v565 = vsel %vm469, %v367, 0
        %v568 = vsel %vm469, %v370, 0
        %v571 = vsel %vm469, %v550, 0
        %v574 = vsel %vm469, %v551, 0
        %v577 = vsel %vm469, %v552, 0
        %v580 = vsel %vm469, %v553, 0
        %v583 = vsel %vm469, %v554, 0
        %v586 = vsel %vm469, %v555, 0
        %v589 = vsel %vm469, %v556, 0
        %v592 = vsel %vm469, %v557, 0
        %594 = vmatpush.xpose.msra.mxu0 0.0
        %595 = vmatpush.xpose.msra.mxu0 0.0
        %596 = vmatpush.xpose.msra.mxu0 0.0
        %597 = vmatpush.xpose.msra.mxu0 0.0
        %598 = vmatpush.xpose.msra.mxu0 0.0
        %599 = vmatpush.xpose.msra.mxu0 0.0
        %600 = vmatpush.xpose.msra.mxu0 0.0
        %601 = vmatpush.xpose.msra.mxu0 0.0
        %602 = vmatpush.xpose.msra.mxu0 %v592
        %603 = vmatpush.xpose.msra.mxu0 %v589
        %604 = vmatpush.xpose.msra.mxu0 %v586
        %605 = vmatpush.xpose.msra.mxu0 %v583
        %606 = vmatpush.xpose.msra.mxu0 %v580
        %607 = vmatpush.xpose.msra.mxu0 %v577
        %608 = vmatpush.xpose.msra.mxu0 %v574
        %609 = vmatpush.xpose.msra.mxu0 %v571
        %610 = vmatmul.f32.gmra.mxu0 %v559
        %v611 = vpop.f32.mrf.mxu0
        %v612 = vadd.f32 0.0, %v611
        %613 = vmatmul.f32.gmra.mxu0 %v562
        %v614 = vpop.f32.mrf.mxu0
        %v615 = vadd.f32 0.0, %v614
        %616 = vmatmul.f32.gmra.mxu0 %v565
        %v617 = vpop.f32.mrf.mxu0
        %v618 = vadd.f32 0.0, %v617
        %619 = vmatmul.f32.gmra.mxu0 %v568
        %v620 = vpop.f32.mrf.mxu0
        %v621 = vadd.f32 0.0, %v620
        %622 = vdwg.mxu0
        %623 = vst.msk [vmem:[%s191] sm:$0xff] %vm469, %v612
        %624 = vst.msk [vmem:[%s191 + $0x8] sm:$0xff] %vm469, %v615
        %625 = vst.msk [vmem:[%s191 + $0x10] sm:$0xff] %vm469, %v618
        %626 = vst.msk [vmem:[%s191 + $0x18] sm:$0xff] %vm469, %v621
        %s627 = scalar_lea.vmem %s168, 32 [#allocation2]
        %v628 = vld [vmem:[%s627] sm:$0xff]
        %v629 = vld [vmem:[%s627 + $0x8] sm:$0xff]
        %v630 = vld [vmem:[%s627 + $0x10] sm:$0xff]
        %v631 = vld [vmem:[%s627 + $0x18] sm:$0xff]
        %632 = vmatpush.msra.mxu0 0.0
        %633 = vmatpush.msra.mxu0 0.0
        %634 = vmatpush.msra.mxu0 0.0
        %635 = vmatpush.msra.mxu0 0.0
        %636 = vmatpush.msra.mxu0 0.0
        %637 = vmatpush.msra.mxu0 0.0
        %638 = vmatpush.msra.mxu0 0.0
        %639 = vmatpush.msra.mxu0 0.0
        %640 = vmatpush.msra.mxu0 0.0
        %641 = vmatpush.msra.mxu0 0.0
        %642 = vmatpush.msra.mxu0 0.0
        %643 = vmatpush.msra.mxu0 0.0
        %644 = vmatpush.msra.mxu0 %v631
        %645 = vmatpush.msra.mxu0 %v630
        %646 = vmatpush.msra.mxu0 %v629
        %647 = vmatpush.msra.mxu0 %v628
        %648 = vmatmul.f32.gmra.mxu0 %v284
        %v649 = vpop.f32.mrf.mxu0
        %v650 = vadd.f32 %v225, %v649
        %651 = vmatmul.f32.gmra.mxu0 %v287
        %v652 = vpop.f32.mrf.mxu0
        %v653 = vadd.f32 %v230, %v652
        %654 = vmatmul.f32.gmra.mxu0 %v290
        %v655 = vpop.f32.mrf.mxu0
        %v656 = vadd.f32 %v235, %v655
        %657 = vmatmul.f32.gmra.mxu0 %v293
        %v658 = vpop.f32.mrf.mxu0
        %v659 = vadd.f32 %v240, %v658
        %660 = vmatmul.f32.gmra.mxu0 %v296
        %v661 = vpop.f32.mrf.mxu0
        %v662 = vadd.f32 %v245, %v661
        %663 = vmatmul.f32.gmra.mxu0 %v299
        %v664 = vpop.f32.mrf.mxu0
        %v665 = vadd.f32 %v250, %v664
        %666 = vmatmul.f32.gmra.mxu0 %v302
        %v667 = vpop.f32.mrf.mxu0
        %v668 = vadd.f32 %v255, %v667
        %669 = vmatmul.f32.gmra.mxu0 %v305
        %v670 = vpop.f32.mrf.mxu0
        %v671 = vadd.f32 %v260, %v670
        %672 = vmatmul.f32.gmra.mxu0 %v308
        %v673 = vpop.f32.mrf.mxu0
        %v674 = vadd.f32 %v265, %v673
        %675 = vmatmul.f32.gmra.mxu0 %v311
        %v676 = vpop.f32.mrf.mxu0
        %v677 = vadd.f32 %v270, %v676
        %678 = vmatmul.f32.gmra.mxu0 %v314
        %v679 = vpop.f32.mrf.mxu0
        %v680 = vadd.f32 %v275, %v679
        %681 = vmatmul.f32.gmra.mxu0 %v317
        %v682 = vpop.f32.mrf.mxu0
        %v683 = vadd.f32 %v280, %v682
        %684 = vdwg.mxu0
        %685 = vxpose.xlu0.b32.start [1/16] %v650, 128
        %686 = vxpose.xlu0.b32.cont [2/16] %v653, 128
        %687 = vxpose.xlu0.b32.cont [3/16] %v656, 128
        %688 = vxpose.xlu0.b32.cont [4/16] %v659, 128
        %689 = vxpose.xlu0.b32.cont [5/16] 0.0, 128
        %690 = vxpose.xlu0.b32.cont [6/16] 0.0, 128
        %691 = vxpose.xlu0.b32.cont [7/16] 0.0, 128
        %692 = vxpose.xlu0.b32.cont [8/16] 0.0, 128
        %693 = vxpose.xlu0.b32.cont [9/16] 0.0, 128
        %694 = vxpose.xlu0.b32.cont [10/16] 0.0, 128
        %695 = vxpose.xlu0.b32.cont [11/16] 0.0, 128
        %696 = vxpose.xlu0.b32.cont [12/16] 0.0, 128
        %697 = vxpose.xlu0.b32.cont [13/16] 0.0, 128
        %698 = vxpose.xlu0.b32.cont [14/16] 0.0, 128
        %699 = vxpose.xlu0.b32.cont [15/16] 0.0, 128
        %700 = vxpose.xlu0.b32.end [16/16] 0.0, 128
        %v701 = vpop.trf.xlu0
        %v702 = vpop.trf.xlu0
        %v703 = vpop.trf.xlu0
        %v704 = vpop.trf.xlu0
        %v705 = vpop.trf.xlu0
        %v706 = vpop.trf.xlu0
        %v707 = vpop.trf.xlu0
        %v708 = vpop.trf.xlu0
        %v709 = vpop.trf.xlu0
        %v710 = vpop.trf.xlu0
        %v711 = vpop.trf.xlu0
        %v712 = vpop.trf.xlu0
        %v713 = vpop.trf.xlu0
        %v714 = vpop.trf.xlu0
        %v715 = vpop.trf.xlu0
        %v716 = vpop.trf.xlu0
        %v718 = vsel %vm282, %v701, 0
        %v721 = vsel %vm282, %v702, 0
        %v724 = vsel %vm282, %v703, 0
        %v727 = vsel %vm282, %v704, 0
        %v730 = vsel %vm282, %v705, 0
        %v733 = vsel %vm282, %v706, 0
        %v736 = vsel %vm282, %v707, 0
        %v739 = vsel %vm282, %v708, 0
        %741 = vmatpush.msra.mxu0 0.0
        %742 = vmatpush.msra.mxu0 0.0
        %743 = vmatpush.msra.mxu0 0.0
        %744 = vmatpush.msra.mxu0 0.0
        %745 = vmatpush.msra.mxu0 0.0
        %746 = vmatpush.msra.mxu0 0.0
        %747 = vmatpush.msra.mxu0 0.0
        %748 = vmatpush.msra.mxu0 0.0
        %749 = vmatpush.msra.mxu0 0.0
        %750 = vmatpush.msra.mxu0 0.0
        %751 = vmatpush.msra.mxu0 0.0
        %752 = vmatpush.msra.mxu0 0.0
        %753 = vmatpush.msra.mxu0 %v671
        %754 = vmatpush.msra.mxu0 %v668
        %755 = vmatpush.msra.mxu0 %v665
        %756 = vmatpush.msra.mxu0 %v662
        %757 = vmatmul.f32.gmra.mxu0 %v718
        %v758 = vpop.f32.mrf.mxu0
        %v759 = vadd.f32 0.0, %v758
        %760 = vmatmul.f32.gmra.mxu0 %v721
        %v761 = vpop.f32.mrf.mxu0
        %v762 = vadd.f32 0.0, %v761
        %763 = vmatmul.f32.gmra.mxu0 %v724
        %v764 = vpop.f32.mrf.mxu0
        %v765 = vadd.f32 0.0, %v764
        %766 = vmatmul.f32.gmra.mxu0 %v727
        %v767 = vpop.f32.mrf.mxu0
        %v768 = vadd.f32 0.0, %v767
        %769 = vmatmul.f32.gmra.mxu0 %v730
        %v770 = vpop.f32.mrf.mxu0
        %v771 = vadd.f32 0.0, %v770
        %772 = vmatmul.f32.gmra.mxu0 %v733
        %v773 = vpop.f32.mrf.mxu0
        %v774 = vadd.f32 0.0, %v773
        %775 = vmatmul.f32.gmra.mxu0 %v736
        %v776 = vpop.f32.mrf.mxu0
        %v777 = vadd.f32 0.0, %v776
        %778 = vmatmul.f32.gmra.mxu0 %v739
        %v779 = vpop.f32.mrf.mxu0
        %v780 = vadd.f32 0.0, %v779
        %781 = vdwg.mxu0
        %v782 = vsel %vm469, %v759, -inf
        %783 = vmax.xlane.f32.xlu0 %v782
        %v784 = vpop.xlane.xlu0 %783
        %v785 = vsel %vm469, %v762, -inf
        %786 = vmax.xlane.f32.xlu0 %v785
        %v787 = vpop.xlane.xlu0 %786
        %v788 = vsel %vm469, %v765, -inf
        %789 = vmax.xlane.f32.xlu0 %v788
        %v790 = vpop.xlane.xlu0 %789
        %v791 = vsel %vm469, %v768, -inf
        %792 = vmax.xlane.f32.xlu0 %v791
        %v793 = vpop.xlane.xlu0 %792
        %v794 = vsel %vm469, %v771, -inf
        %795 = vmax.xlane.f32.xlu0 %v794
        %v796 = vpop.xlane.xlu0 %795
        %v797 = vsel %vm469, %v774, -inf
        %798 = vmax.xlane.f32.xlu0 %v797
        %v799 = vpop.xlane.xlu0 %798
        %v800 = vsel %vm469, %v777, -inf
        %801 = vmax.xlane.f32.xlu0 %v800
        %v802 = vpop.xlane.xlu0 %801
        %v803 = vsel %vm469, %v780, -inf
        %804 = vmax.xlane.f32.xlu0 %v803
        %v805 = vpop.xlane.xlu0 %804
        %v806 = vsub.f32 %v759, %v784
        %v807 = vsub.f32 %v762, %v787
        %v808 = vsub.f32 %v765, %v790
        %v809 = vsub.f32 %v768, %v793
        %v810 = vsub.f32 %v771, %v796
        %v811 = vsub.f32 %v774, %v799
        %v812 = vsub.f32 %v777, %v802
        %v813 = vsub.f32 %v780, %v805
        %v814 = vmul.f32 %v806, 1.442695
        %v815 = vpow.pop %v814
        %v816 = vmul.f32 %v807, 1.442695
        %v817 = vpow.pop %v816
        %v818 = vmul.f32 %v808, 1.442695
        %v819 = vpow.pop %v818
        %v820 = vmul.f32 %v809, 1.442695
        %v821 = vpow.pop %v820
        %v822 = vmul.f32 %v810, 1.442695
        %v823 = vpow.pop %v822
        %v824 = vmul.f32 %v811, 1.442695
        %v825 = vpow.pop %v824
        %v826 = vmul.f32 %v812, 1.442695
        %v827 = vpow.pop %v826
        %v828 = vmul.f32 %v813, 1.442695
        %v829 = vpow.pop %v828
        %v830 = vsel %vm469, %v815, 0.0
        %831 = vadd.xlane.f32.xlu0 %v830
        %v832 = vpop.xlane.xlu0 %831
        %v833 = vsel %vm469, %v817, 0.0
        %834 = vadd.xlane.f32.xlu0 %v833
        %v835 = vpop.xlane.xlu0 %834
        %v836 = vsel %vm469, %v819, 0.0
        %837 = vadd.xlane.f32.xlu0 %v836
        %v838 = vpop.xlane.xlu0 %837
        %v839 = vsel %vm469, %v821, 0.0
        %840 = vadd.xlane.f32.xlu0 %v839
        %v841 = vpop.xlane.xlu0 %840
        %v842 = vsel %vm469, %v823, 0.0
        %843 = vadd.xlane.f32.xlu0 %v842
        %v844 = vpop.xlane.xlu0 %843
        %v845 = vsel %vm469, %v825, 0.0
        %846 = vadd.xlane.f32.xlu0 %v845
        %v847 = vpop.xlane.xlu0 %846
        %v848 = vsel %vm469, %v827, 0.0
        %849 = vadd.xlane.f32.xlu0 %v848
        %v850 = vpop.xlane.xlu0 %849
        %v851 = vsel %vm469, %v829, 0.0
        %852 = vadd.xlane.f32.xlu0 %v851
        %v853 = vpop.xlane.xlu0 %852
        %v854 = vrcp.pop %v832
        %v855 = vrcp.pop %v835
        %v856 = vrcp.pop %v838
        %v857 = vrcp.pop %v841
        %v858 = vrcp.pop %v844
        %v859 = vrcp.pop %v847
        %v860 = vrcp.pop %v850
        %v861 = vrcp.pop %v853
        %v862 = vmul.f32 %v815, %v854
        %v863 = vmul.f32 %v817, %v855
        %v864 = vmul.f32 %v819, %v856
        %v865 = vmul.f32 %v821, %v857
        %v866 = vmul.f32 %v823, %v858
        %v867 = vmul.f32 %v825, %v859
        %v868 = vmul.f32 %v827, %v860
        %v869 = vmul.f32 %v829, %v861
        %v871 = vsel %vm469, %v674, 0
        %v874 = vsel %vm469, %v677, 0
        %v877 = vsel %vm469, %v680, 0
        %v880 = vsel %vm469, %v683, 0
        %v883 = vsel %vm469, %v862, 0
        %v886 = vsel %vm469, %v863, 0
        %v889 = vsel %vm469, %v864, 0
        %v892 = vsel %vm469, %v865, 0
        %v895 = vsel %vm469, %v866, 0
        %v898 = vsel %vm469, %v867, 0
        %v901 = vsel %vm469, %v868, 0
        %v904 = vsel %vm469, %v869, 0
        %906 = vmatpush.xpose.msra.mxu0 0.0
        %907 = vmatpush.xpose.msra.mxu0 0.0
        %908 = vmatpush.xpose.msra.mxu0 0.0
        %909 = vmatpush.xpose.msra.mxu0 0.0
        %910 = vmatpush.xpose.msra.mxu0 0.0
        %911 = vmatpush.xpose.msra.mxu0 0.0
        %912 = vmatpush.xpose.msra.mxu0 0.0
        %913 = vmatpush.xpose.msra.mxu0 0.0
        %914 = vmatpush.xpose.msra.mxu0 %v904
        %915 = vmatpush.xpose.msra.mxu0 %v901
        %916 = vmatpush.xpose.msra.mxu0 %v898
        %917 = vmatpush.xpose.msra.mxu0 %v895
        %918 = vmatpush.xpose.msra.mxu0 %v892
        %919 = vmatpush.xpose.msra.mxu0 %v889
        %920 = vmatpush.xpose.msra.mxu0 %v886
        %921 = vmatpush.xpose.msra.mxu0 %v883
        %922 = vmatmul.f32.gmra.mxu0 %v871
        %v923 = vpop.f32.mrf.mxu0
        %v924 = vadd.f32 0.0, %v923
        %925 = vmatmul.f32.gmra.mxu0 %v874
        %v926 = vpop.f32.mrf.mxu0
        %v927 = vadd.f32 0.0, %v926
        %928 = vmatmul.f32.gmra.mxu0 %v877
        %v929 = vpop.f32.mrf.mxu0
        %v930 = vadd.f32 0.0, %v929
        %931 = vmatmul.f32.gmra.mxu0 %v880
        %v932 = vpop.f32.mrf.mxu0
        %v933 = vadd.f32 0.0, %v932
        %934 = vdwg.mxu0
        %s935 = scalar_lea.vmem %s191, 32 [#allocation5]
        %936 = vst.msk [vmem:[%s935] sm:$0xff] %vm469, %v924
        %937 = vst.msk [vmem:[%s935 + $0x8] sm:$0xff] %vm469, %v927
        %938 = vst.msk [vmem:[%s935 + $0x10] sm:$0xff] %vm469, %v930
        %939 = vst.msk [vmem:[%s935 + $0x18] sm:$0xff] %vm469, %v933
        %s940 = scalar_lea.vmem %s168, 64 [#allocation2]
        %v941 = vld [vmem:[%s940] sm:$0xff]
        %v942 = vld [vmem:[%s940 + $0x8] sm:$0xff]
        %v943 = vld [vmem:[%s940 + $0x10] sm:$0xff]
        %v944 = vld [vmem:[%s940 + $0x18] sm:$0xff]
        %945 = vmatpush.msra.mxu0 0.0
        %946 = vmatpush.msra.mxu0 0.0
        %947 = vmatpush.msra.mxu0 0.0
        %948 = vmatpush.msra.mxu0 0.0
        %949 = vmatpush.msra.mxu0 0.0
        %950 = vmatpush.msra.mxu0 0.0
        %951 = vmatpush.msra.mxu0 0.0
        %952 = vmatpush.msra.mxu0 0.0
        %953 = vmatpush.msra.mxu0 0.0
        %954 = vmatpush.msra.mxu0 0.0
        %955 = vmatpush.msra.mxu0 0.0
        %956 = vmatpush.msra.mxu0 0.0
        %957 = vmatpush.msra.mxu0 %v944
        %958 = vmatpush.msra.mxu0 %v943
        %959 = vmatpush.msra.mxu0 %v942
        %960 = vmatpush.msra.mxu0 %v941
        %961 = vmatmul.f32.gmra.mxu0 %v284
        %v962 = vpop.f32.mrf.mxu0
        %v963 = vadd.f32 %v225, %v962
        %964 = vmatmul.f32.gmra.mxu0 %v287
        %v965 = vpop.f32.mrf.mxu0
        %v966 = vadd.f32 %v230, %v965
        %967 = vmatmul.f32.gmra.mxu0 %v290
        %v968 = vpop.f32.mrf.mxu0
        %v969 = vadd.f32 %v235, %v968
        %970 = vmatmul.f32.gmra.mxu0 %v293
        %v971 = vpop.f32.mrf.mxu0
        %v972 = vadd.f32 %v240, %v971
        %973 = vmatmul.f32.gmra.mxu0 %v296
        %v974 = vpop.f32.mrf.mxu0
        %v975 = vadd.f32 %v245, %v974
        %976 = vmatmul.f32.gmra.mxu0 %v299
        %v977 = vpop.f32.mrf.mxu0
        %v978 = vadd.f32 %v250, %v977
        %979 = vmatmul.f32.gmra.mxu0 %v302
        %v980 = vpop.f32.mrf.mxu0
        %v981 = vadd.f32 %v255, %v980
        %982 = vmatmul.f32.gmra.mxu0 %v305
        %v983 = vpop.f32.mrf.mxu0
        %v984 = vadd.f32 %v260, %v983
        %985 = vmatmul.f32.gmra.mxu0 %v308
        %v986 = vpop.f32.mrf.mxu0
        %v987 = vadd.f32 %v265, %v986
        %988 = vmatmul.f32.gmra.mxu0 %v311
        %v989 = vpop.f32.mrf.mxu0
        %v990 = vadd.f32 %v270, %v989
        %991 = vmatmul.f32.gmra.mxu0 %v314
        %v992 = vpop.f32.mrf.mxu0
        %v993 = vadd.f32 %v275, %v992
        %994 = vmatmul.f32.gmra.mxu0 %v317
        %v995 = vpop.f32.mrf.mxu0
        %v996 = vadd.f32 %v280, %v995
        %997 = vdwg.mxu0
        %998 = vxpose.xlu0.b32.start [1/16] %v963, 128
        %999 = vxpose.xlu0.b32.cont [2/16] %v966, 128
        %1000 = vxpose.xlu0.b32.cont [3/16] %v969, 128
        %1001 = vxpose.xlu0.b32.cont [4/16] %v972, 128
        %1002 = vxpose.xlu0.b32.cont [5/16] 0.0, 128
        %1003 = vxpose.xlu0.b32.cont [6/16] 0.0, 128
        %1004 = vxpose.xlu0.b32.cont [7/16] 0.0, 128
        %1005 = vxpose.xlu0.b32.cont [8/16] 0.0, 128
        %1006 = vxpose.xlu0.b32.cont [9/16] 0.0, 128
        %1007 = vxpose.xlu0.b32.cont [10/16] 0.0, 128
        %1008 = vxpose.xlu0.b32.cont [11/16] 0.0, 128
        %1009 = vxpose.xlu0.b32.cont [12/16] 0.0, 128
        %1010 = vxpose.xlu0.b32.cont [13/16] 0.0, 128
        %1011 = vxpose.xlu0.b32.cont [14/16] 0.0, 128
        %1012 = vxpose.xlu0.b32.cont [15/16] 0.0, 128
        %1013 = vxpose.xlu0.b32.end [16/16] 0.0, 128
        %v1014 = vpop.trf.xlu0
        %v1015 = vpop.trf.xlu0
        %v1016 = vpop.trf.xlu0
        %v1017 = vpop.trf.xlu0
        %v1018 = vpop.trf.xlu0
        %v1019 = vpop.trf.xlu0
        %v1020 = vpop.trf.xlu0
        %v1021 = vpop.trf.xlu0
        %v1022 = vpop.trf.xlu0
        %v1023 = vpop.trf.xlu0
        %v1024 = vpop.trf.xlu0
        %v1025 = vpop.trf.xlu0
        %v1026 = vpop.trf.xlu0
        %v1027 = vpop.trf.xlu0
        %v1028 = vpop.trf.xlu0
        %v1029 = vpop.trf.xlu0
        %v1031 = vsel %vm282, %v1014, 0
        %v1034 = vsel %vm282, %v1015, 0
        %v1037 = vsel %vm282, %v1016, 0
        %v1040 = vsel %vm282, %v1017, 0
        %v1043 = vsel %vm282, %v1018, 0
        %v1046 = vsel %vm282, %v1019, 0
        %v1049 = vsel %vm282, %v1020, 0
        %v1052 = vsel %vm282, %v1021, 0
        %1054 = vmatpush.msra.mxu0 0.0
        %1055 = vmatpush.msra.mxu0 0.0
        %1056 = vmatpush.msra.mxu0 0.0
        %1057 = vmatpush.msra.mxu0 0.0
        %1058 = vmatpush.msra.mxu0 0.0
        %1059 = vmatpush.msra.mxu0 0.0
        %1060 = vmatpush.msra.mxu0 0.0
        %1061 = vmatpush.msra.mxu0 0.0
        %1062 = vmatpush.msra.mxu0 0.0
        %1063 = vmatpush.msra.mxu0 0.0
        %1064 = vmatpush.msra.mxu0 0.0
        %1065 = vmatpush.msra.mxu0 0.0
        %1066 = vmatpush.msra.mxu0 %v984
        %1067 = vmatpush.msra.mxu0 %v981
        %1068 = vmatpush.msra.mxu0 %v978
        %1069 = vmatpush.msra.mxu0 %v975
        %1070 = vmatmul.f32.gmra.mxu0 %v1031
        %v1071 = vpop.f32.mrf.mxu0
        %v1072 = vadd.f32 0.0, %v1071
        %1073 = vmatmul.f32.gmra.mxu0 %v1034
        %v1074 = vpop.f32.mrf.mxu0
        %v1075 = vadd.f32 0.0, %v1074
        %1076 = vmatmul.f32.gmra.mxu0 %v1037
        %v1077 = vpop.f32.mrf.mxu0
        %v1078 = vadd.f32 0.0, %v1077
        %1079 = vmatmul.f32.gmra.mxu0 %v1040
        %v1080 = vpop.f32.mrf.mxu0
        %v1081 = vadd.f32 0.0, %v1080
        %1082 = vmatmul.f32.gmra.mxu0 %v1043
        %v1083 = vpop.f32.mrf.mxu0
        %v1084 = vadd.f32 0.0, %v1083
        %1085 = vmatmul.f32.gmra.mxu0 %v1046
        %v1086 = vpop.f32.mrf.mxu0
        %v1087 = vadd.f32 0.0, %v1086
        %1088 = vmatmul.f32.gmra.mxu0 %v1049
        %v1089 = vpop.f32.mrf.mxu0
        %v1090 = vadd.f32 0.0, %v1089
        %1091 = vmatmul.f32.gmra.mxu0 %v1052
        %v1092 = vpop.f32.mrf.mxu0
        %v1093 = vadd.f32 0.0, %v1092
        %1094 = vdwg.mxu0
        %v1095 = vsel %vm469, %v1072, -inf
        %1096 = vmax.xlane.f32.xlu0 %v1095
        %v1097 = vpop.xlane.xlu0 %1096
        %v1098 = vsel %vm469, %v1075, -inf
        %1099 = vmax.xlane.f32.xlu0 %v1098
        %v1100 = vpop.xlane.xlu0 %1099
        %v1101 = vsel %vm469, %v1078, -inf
        %1102 = vmax.xlane.f32.xlu0 %v1101
        %v1103 = vpop.xlane.xlu0 %1102
        %v1104 = vsel %vm469, %v1081, -inf
        %1105 = vmax.xlane.f32.xlu0 %v1104
        %v1106 = vpop.xlane.xlu0 %1105
        %v1107 = vsel %vm469, %v1084, -inf
        %1108 = vmax.xlane.f32.xlu0 %v1107
        %v1109 = vpop.xlane.xlu0 %1108
        %v1110 = vsel %vm469, %v1087, -inf
        %1111 = vmax.xlane.f32.xlu0 %v1110
        %v1112 = vpop.xlane.xlu0 %1111
        %v1113 = vsel %vm469, %v1090, -inf
        %1114 = vmax.xlane.f32.xlu0 %v1113
        %v1115 = vpop.xlane.xlu0 %1114
        %v1116 = vsel %vm469, %v1093, -inf
        %1117 = vmax.xlane.f32.xlu0 %v1116
        %v1118 = vpop.xlane.xlu0 %1117
        %v1119 = vsub.f32 %v1072, %v1097
        %v1120 = vsub.f32 %v1075, %v1100
        %v1121 = vsub.f32 %v1078, %v1103
        %v1122 = vsub.f32 %v1081, %v1106
        %v1123 = vsub.f32 %v1084, %v1109
        %v1124 = vsub.f32 %v1087, %v1112
        %v1125 = vsub.f32 %v1090, %v1115
        %v1126 = vsub.f32 %v1093, %v1118
        %v1127 = vmul.f32 %v1119, 1.442695
        %v1128 = vpow.pop %v1127
        %v1129 = vmul.f32 %v1120, 1.442695
        %v1130 = vpow.pop %v1129
        %v1131 = vmul.f32 %v1121, 1.442695
        %v1132 = vpow.pop %v1131
        %v1133 = vmul.f32 %v1122, 1.442695
        %v1134 = vpow.pop %v1133
        %v1135 = vmul.f32 %v1123, 1.442695
        %v1136 = vpow.pop %v1135
        %v1137 = vmul.f32 %v1124, 1.442695
        %v1138 = vpow.pop %v1137
        %v1139 = vmul.f32 %v1125, 1.442695
        %v1140 = vpow.pop %v1139
        %v1141 = vmul.f32 %v1126, 1.442695
        %v1142 = vpow.pop %v1141
        %v1143 = vsel %vm469, %v1128, 0.0
        %1144 = vadd.xlane.f32.xlu0 %v1143
        %v1145 = vpop.xlane.xlu0 %1144
        %v1146 = vsel %vm469, %v1130, 0.0
        %1147 = vadd.xlane.f32.xlu0 %v1146
        %v1148 = vpop.xlane.xlu0 %1147
        %v1149 = vsel %vm469, %v1132, 0.0
        %1150 = vadd.xlane.f32.xlu0 %v1149
        %v1151 = vpop.xlane.xlu0 %1150
        %v1152 = vsel %vm469, %v1134, 0.0
        %1153 = vadd.xlane.f32.xlu0 %v1152
        %v1154 = vpop.xlane.xlu0 %1153
        %v1155 = vsel %vm469, %v1136, 0.0
        %1156 = vadd.xlane.f32.xlu0 %v1155
        %v1157 = vpop.xlane.xlu0 %1156
        %v1158 = vsel %vm469, %v1138, 0.0
        %1159 = vadd.xlane.f32.xlu0 %v1158
        %v1160 = vpop.xlane.xlu0 %1159
        %v1161 = vsel %vm469, %v1140, 0.0
        %1162 = vadd.xlane.f32.xlu0 %v1161
        %v1163 = vpop.xlane.xlu0 %1162
        %v1164 = vsel %vm469, %v1142, 0.0
        %1165 = vadd.xlane.f32.xlu0 %v1164
        %v1166 = vpop.xlane.xlu0 %1165
        %v1167 = vrcp.pop %v1145
        %v1168 = vrcp.pop %v1148
        %v1169 = vrcp.pop %v1151
        %v1170 = vrcp.pop %v1154
        %v1171 = vrcp.pop %v1157
        %v1172 = vrcp.pop %v1160
        %v1173 = vrcp.pop %v1163
        %v1174 = vrcp.pop %v1166
        %v1175 = vmul.f32 %v1128, %v1167
        %v1176 = vmul.f32 %v1130, %v1168
        %v1177 = vmul.f32 %v1132, %v1169
        %v1178 = vmul.f32 %v1134, %v1170
        %v1179 = vmul.f32 %v1136, %v1171
        %v1180 = vmul.f32 %v1138, %v1172
        %v1181 = vmul.f32 %v1140, %v1173
        %v1182 = vmul.f32 %v1142, %v1174
        %v1184 = vsel %vm469, %v987, 0
        %v1187 = vsel %vm469, %v990, 0
        %v1190 = vsel %vm469, %v993, 0
        %v1193 = vsel %vm469, %v996, 0
        %v1196 = vsel %vm469, %v1175, 0
        %v1199 = vsel %vm469, %v1176, 0
        %v1202 = vsel %vm469, %v1177, 0
        %v1205 = vsel %vm469, %v1178, 0
        %v1208 = vsel %vm469, %v1179, 0
        %v1211 = vsel %vm469, %v1180, 0
        %v1214 = vsel %vm469, %v1181, 0
        %v1217 = vsel %vm469, %v1182, 0
        %1219 = vmatpush.xpose.msra.mxu0 0.0
        %1220 = vmatpush.xpose.msra.mxu0 0.0
        %1221 = vmatpush.xpose.msra.mxu0 0.0
        %1222 = vmatpush.xpose.msra.mxu0 0.0
        %1223 = vmatpush.xpose.msra.mxu0 0.0
        %1224 = vmatpush.xpose.msra.mxu0 0.0
        %1225 = vmatpush.xpose.msra.mxu0 0.0
        %1226 = vmatpush.xpose.msra.mxu0 0.0
        %1227 = vmatpush.xpose.msra.mxu0 %v1217
        %1228 = vmatpush.xpose.msra.mxu0 %v1214
        %1229 = vmatpush.xpose.msra.mxu0 %v1211
        %1230 = vmatpush.xpose.msra.mxu0 %v1208
        %1231 = vmatpush.xpose.msra.mxu0 %v1205
        %1232 = vmatpush.xpose.msra.mxu0 %v1202
        %1233 = vmatpush.xpose.msra.mxu0 %v1199
        %1234 = vmatpush.xpose.msra.mxu0 %v1196
        %1235 = vmatmul.f32.gmra.mxu0 %v1184
        %v1236 = vpop.f32.mrf.mxu0
        %v1237 = vadd.f32 0.0, %v1236
        %1238 = vmatmul.f32.gmra.mxu0 %v1187
        %v1239 = vpop.f32.mrf.mxu0
        %v1240 = vadd.f32 0.0, %v1239
        %1241 = vmatmul.f32.gmra.mxu0 %v1190
        %v1242 = vpop.f32.mrf.mxu0
        %v1243 = vadd.f32 0.0, %v1242
        %1244 = vmatmul.f32.gmra.mxu0 %v1193
        %v1245 = vpop.f32.mrf.mxu0
        %v1246 = vadd.f32 0.0, %v1245
        %1247 = vdwg.mxu0
        %s1248 = scalar_lea.vmem %s191, 64 [#allocation5]
        %1249 = vst.msk [vmem:[%s1248] sm:$0xff] %vm469, %v1237
        %1250 = vst.msk [vmem:[%s1248 + $0x8] sm:$0xff] %vm469, %v1240
        %1251 = vst.msk [vmem:[%s1248 + $0x10] sm:$0xff] %vm469, %v1243
        %1252 = vst.msk [vmem:[%s1248 + $0x18] sm:$0xff] %vm469, %v1246
        %s1253 = scalar_lea.vmem %s168, 96 [#allocation2]
        %v1254 = vld [vmem:[%s1253] sm:$0xff]
        %v1255 = vld [vmem:[%s1253 + $0x8] sm:$0xff]
        %v1256 = vld [vmem:[%s1253 + $0x10] sm:$0xff]
        %v1257 = vld [vmem:[%s1253 + $0x18] sm:$0xff]
        %1258 = vmatpush.msra.mxu0 0.0
        %1259 = vmatpush.msra.mxu0 0.0
        %1260 = vmatpush.msra.mxu0 0.0
        %1261 = vmatpush.msra.mxu0 0.0
        %1262 = vmatpush.msra.mxu0 0.0
        %1263 = vmatpush.msra.mxu0 0.0
        %1264 = vmatpush.msra.mxu0 0.0
        %1265 = vmatpush.msra.mxu0 0.0
        %1266 = vmatpush.msra.mxu0 0.0
        %1267 = vmatpush.msra.mxu0 0.0
        %1268 = vmatpush.msra.mxu0 0.0
        %1269 = vmatpush.msra.mxu0 0.0
        %1270 = vmatpush.msra.mxu0 %v1257
        %1271 = vmatpush.msra.mxu0 %v1256
        %1272 = vmatpush.msra.mxu0 %v1255
        %1273 = vmatpush.msra.mxu0 %v1254
        %1274 = vmatmul.f32.gmra.mxu0 %v284
        %v1275 = vpop.f32.mrf.mxu0
        %v1276 = vadd.f32 %v225, %v1275
        %1277 = vmatmul.f32.gmra.mxu0 %v287
        %v1278 = vpop.f32.mrf.mxu0
        %v1279 = vadd.f32 %v230, %v1278
        %1280 = vmatmul.f32.gmra.mxu0 %v290
        %v1281 = vpop.f32.mrf.mxu0
        %v1282 = vadd.f32 %v235, %v1281
        %1283 = vmatmul.f32.gmra.mxu0 %v293
        %v1284 = vpop.f32.mrf.mxu0
        %v1285 = vadd.f32 %v240, %v1284
        %1286 = vmatmul.f32.gmra.mxu0 %v296
        %v1287 = vpop.f32.mrf.mxu0
        %v1288 = vadd.f32 %v245, %v1287
        %1289 = vmatmul.f32.gmra.mxu0 %v299
        %v1290 = vpop.f32.mrf.mxu0
        %v1291 = vadd.f32 %v250, %v1290
        %1292 = vmatmul.f32.gmra.mxu0 %v302
        %v1293 = vpop.f32.mrf.mxu0
        %v1294 = vadd.f32 %v255, %v1293
        %1295 = vmatmul.f32.gmra.mxu0 %v305
        %v1296 = vpop.f32.mrf.mxu0
        %v1297 = vadd.f32 %v260, %v1296
        %1298 = vmatmul.f32.gmra.mxu0 %v308
        %v1299 = vpop.f32.mrf.mxu0
        %v1300 = vadd.f32 %v265, %v1299
        %1301 = vmatmul.f32.gmra.mxu0 %v311
        %v1302 = vpop.f32.mrf.mxu0
        %v1303 = vadd.f32 %v270, %v1302
        %1304 = vmatmul.f32.gmra.mxu0 %v314
        %v1305 = vpop.f32.mrf.mxu0
        %v1306 = vadd.f32 %v275, %v1305
        %1307 = vmatmul.f32.gmra.mxu0 %v317
        %v1308 = vpop.f32.mrf.mxu0
        %v1309 = vadd.f32 %v280, %v1308
        %1310 = vdwg.mxu0
        %1311 = vxpose.xlu0.b32.start [1/16] %v1276, 128
        %1312 = vxpose.xlu0.b32.cont [2/16] %v1279, 128
        %1313 = vxpose.xlu0.b32.cont [3/16] %v1282, 128
        %1314 = vxpose.xlu0.b32.cont [4/16] %v1285, 128
        %1315 = vxpose.xlu0.b32.cont [5/16] 0.0, 128
        %1316 = vxpose.xlu0.b32.cont [6/16] 0.0, 128
        %1317 = vxpose.xlu0.b32.cont [7/16] 0.0, 128
        %1318 = vxpose.xlu0.b32.cont [8/16] 0.0, 128
        %1319 = vxpose.xlu0.b32.cont [9/16] 0.0, 128
        %1320 = vxpose.xlu0.b32.cont [10/16] 0.0, 128
        %1321 = vxpose.xlu0.b32.cont [11/16] 0.0, 128
        %1322 = vxpose.xlu0.b32.cont [12/16] 0.0, 128
        %1323 = vxpose.xlu0.b32.cont [13/16] 0.0, 128
        %1324 = vxpose.xlu0.b32.cont [14/16] 0.0, 128
        %1325 = vxpose.xlu0.b32.cont [15/16] 0.0, 128
        %1326 = vxpose.xlu0.b32.end [16/16] 0.0, 128
        %v1327 = vpop.trf.xlu0
        %v1328 = vpop.trf.xlu0
        %v1329 = vpop.trf.xlu0
        %v1330 = vpop.trf.xlu0
        %v1331 = vpop.trf.xlu0
        %v1332 = vpop.trf.xlu0
        %v1333 = vpop.trf.xlu0
        %v1334 = vpop.trf.xlu0
        %v1335 = vpop.trf.xlu0
        %v1336 = vpop.trf.xlu0
        %v1337 = vpop.trf.xlu0
        %v1338 = vpop.trf.xlu0
        %v1339 = vpop.trf.xlu0
        %v1340 = vpop.trf.xlu0
        %v1341 = vpop.trf.xlu0
        %v1342 = vpop.trf.xlu0
        %v1344 = vsel %vm282, %v1327, 0
        %v1347 = vsel %vm282, %v1328, 0
        %v1350 = vsel %vm282, %v1329, 0
        %v1353 = vsel %vm282, %v1330, 0
        %v1356 = vsel %vm282, %v1331, 0
        %v1359 = vsel %vm282, %v1332, 0
        %v1362 = vsel %vm282, %v1333, 0
        %v1365 = vsel %vm282, %v1334, 0
        %1367 = vmatpush.msra.mxu0 0.0
        %1368 = vmatpush.msra.mxu0 0.0
        %1369 = vmatpush.msra.mxu0 0.0
        %1370 = vmatpush.msra.mxu0 0.0
        %1371 = vmatpush.msra.mxu0 0.0
        %1372 = vmatpush.msra.mxu0 0.0
        %1373 = vmatpush.msra.mxu0 0.0
        %1374 = vmatpush.msra.mxu0 0.0
        %1375 = vmatpush.msra.mxu0 0.0
        %1376 = vmatpush.msra.mxu0 0.0
        %1377 = vmatpush.msra.mxu0 0.0
        %1378 = vmatpush.msra.mxu0 0.0
        %1379 = vmatpush.msra.mxu0 %v1297
        %1380 = vmatpush.msra.mxu0 %v1294
        %1381 = vmatpush.msra.mxu0 %v1291
        %1382 = vmatpush.msra.mxu0 %v1288
        %1383 = vmatmul.f32.gmra.mxu0 %v1344
        %v1384 = vpop.f32.mrf.mxu0
        %v1385 = vadd.f32 0.0, %v1384
        %1386 = vmatmul.f32.gmra.mxu0 %v1347
        %v1387 = vpop.f32.mrf.mxu0
        %v1388 = vadd.f32 0.0, %v1387
        %1389 = vmatmul.f32.gmra.mxu0 %v1350
        %v1390 = vpop.f32.mrf.mxu0
        %v1391 = vadd.f32 0.0, %v1390
        %1392 = vmatmul.f32.gmra.mxu0 %v1353
        %v1393 = vpop.f32.mrf.mxu0
        %v1394 = vadd.f32 0.0, %v1393
        %1395 = vmatmul.f32.gmra.mxu0 %v1356
        %v1396 = vpop.f32.mrf.mxu0
        %v1397 = vadd.f32 0.0, %v1396
        %1398 = vmatmul.f32.gmra.mxu0 %v1359
        %v1399 = vpop.f32.mrf.mxu0
        %v1400 = vadd.f32 0.0, %v1399
        %1401 = vmatmul.f32.gmra.mxu0 %v1362
        %v1402 = vpop.f32.mrf.mxu0
        %v1403 = vadd.f32 0.0, %v1402
        %1404 = vmatmul.f32.gmra.mxu0 %v1365
        %v1405 = vpop.f32.mrf.mxu0
        %v1406 = vadd.f32 0.0, %v1405
        %1407 = vdwg.mxu0
        %v1408 = vsel %vm469, %v1385, -inf
        %1409 = vmax.xlane.f32.xlu0 %v1408
        %v1410 = vpop.xlane.xlu0 %1409
        %v1411 = vsel %vm469, %v1388, -inf
        %1412 = vmax.xlane.f32.xlu0 %v1411
        %v1413 = vpop.xlane.xlu0 %1412
        %v1414 = vsel %vm469, %v1391, -inf
        %1415 = vmax.xlane.f32.xlu0 %v1414
        %v1416 = vpop.xlane.xlu0 %1415
        %v1417 = vsel %vm469, %v1394, -inf
        %1418 = vmax.xlane.f32.xlu0 %v1417
        %v1419 = vpop.xlane.xlu0 %1418
        %v1420 = vsel %vm469, %v1397, -inf
        %1421 = vmax.xlane.f32.xlu0 %v1420
        %v1422 = vpop.xlane.xlu0 %1421
        %v1423 = vsel %vm469, %v1400, -inf
        %1424 = vmax.xlane.f32.xlu0 %v1423
        %v1425 = vpop.xlane.xlu0 %1424
        %v1426 = vsel %vm469, %v1403, -inf
        %1427 = vmax.xlane.f32.xlu0 %v1426
        %v1428 = vpop.xlane.xlu0 %1427
        %v1429 = vsel %vm469, %v1406, -inf
        %1430 = vmax.xlane.f32.xlu0 %v1429
        %v1431 = vpop.xlane.xlu0 %1430
        %v1432 = vsub.f32 %v1385, %v1410
        %v1433 = vsub.f32 %v1388, %v1413
        %v1434 = vsub.f32 %v1391, %v1416
        %v1435 = vsub.f32 %v1394, %v1419
        %v1436 = vsub.f32 %v1397, %v1422
        %v1437 = vsub.f32 %v1400, %v1425
        %v1438 = vsub.f32 %v1403, %v1428
        %v1439 = vsub.f32 %v1406, %v1431
        %v1440 = vmul.f32 %v1432, 1.442695
        %v1441 = vpow.pop %v1440
        %v1442 = vmul.f32 %v1433, 1.442695
        %v1443 = vpow.pop %v1442
        %v1444 = vmul.f32 %v1434, 1.442695
        %v1445 = vpow.pop %v1444
        %v1446 = vmul.f32 %v1435, 1.442695
        %v1447 = vpow.pop %v1446
        %v1448 = vmul.f32 %v1436, 1.442695
        %v1449 = vpow.pop %v1448
        %v1450 = vmul.f32 %v1437, 1.442695
        %v1451 = vpow.pop %v1450
        %v1452 = vmul.f32 %v1438, 1.442695
        %v1453 = vpow.pop %v1452
        %v1454 = vmul.f32 %v1439, 1.442695
        %v1455 = vpow.pop %v1454
        %v1456 = vsel %vm469, %v1441, 0.0
        %1457 = vadd.xlane.f32.xlu0 %v1456
        %v1458 = vpop.xlane.xlu0 %1457
        %v1459 = vsel %vm469, %v1443, 0.0
        %1460 = vadd.xlane.f32.xlu0 %v1459
        %v1461 = vpop.xlane.xlu0 %1460
        %v1462 = vsel %vm469, %v1445, 0.0
        %1463 = vadd.xlane.f32.xlu0 %v1462
        %v1464 = vpop.xlane.xlu0 %1463
        %v1465 = vsel %vm469, %v1447, 0.0
        %1466 = vadd.xlane.f32.xlu0 %v1465
        %v1467 = vpop.xlane.xlu0 %1466
        %v1468 = vsel %vm469, %v1449, 0.0
        %1469 = vadd.xlane.f32.xlu0 %v1468
        %v1470 = vpop.xlane.xlu0 %1469
        %v1471 = vsel %vm469, %v1451, 0.0
        %1472 = vadd.xlane.f32.xlu0 %v1471
        %v1473 = vpop.xlane.xlu0 %1472
        %v1474 = vsel %vm469, %v1453, 0.0
        %1475 = vadd.xlane.f32.xlu0 %v1474
        %v1476 = vpop.xlane.xlu0 %1475
        %v1477 = vsel %vm469, %v1455, 0.0
        %1478 = vadd.xlane.f32.xlu0 %v1477
        %v1479 = vpop.xlane.xlu0 %1478
        %v1480 = vrcp.pop %v1458
        %v1481 = vrcp.pop %v1461
        %v1482 = vrcp.pop %v1464
        %v1483 = vrcp.pop %v1467
        %v1484 = vrcp.pop %v1470
        %v1485 = vrcp.pop %v1473
        %v1486 = vrcp.pop %v1476
        %v1487 = vrcp.pop %v1479
        %v1488 = vmul.f32 %v1441, %v1480
        %v1489 = vmul.f32 %v1443, %v1481
        %v1490 = vmul.f32 %v1445, %v1482
        %v1491 = vmul.f32 %v1447, %v1483
        %v1492 = vmul.f32 %v1449, %v1484
        %v1493 = vmul.f32 %v1451, %v1485
        %v1494 = vmul.f32 %v1453, %v1486
        %v1495 = vmul.f32 %v1455, %v1487
        %v1497 = vsel %vm469, %v1300, 0
        %v1500 = vsel %vm469, %v1303, 0
        %v1503 = vsel %vm469, %v1306, 0
        %v1506 = vsel %vm469, %v1309, 0
        %v1509 = vsel %vm469, %v1488, 0
        %v1512 = vsel %vm469, %v1489, 0
        %v1515 = vsel %vm469, %v1490, 0
        %v1518 = vsel %vm469, %v1491, 0
        %v1521 = vsel %vm469, %v1492, 0
        %v1524 = vsel %vm469, %v1493, 0
        %v1527 = vsel %vm469, %v1494, 0
        %v1530 = vsel %vm469, %v1495, 0
        %1532 = vmatpush.xpose.msra.mxu0 0.0
        %1533 = vmatpush.xpose.msra.mxu0 0.0
        %1534 = vmatpush.xpose.msra.mxu0 0.0
        %1535 = vmatpush.xpose.msra.mxu0 0.0
        %1536 = vmatpush.xpose.msra.mxu0 0.0
        %1537 = vmatpush.xpose.msra.mxu0 0.0
        %1538 = vmatpush.xpose.msra.mxu0 0.0
        %1539 = vmatpush.xpose.msra.mxu0 0.0
        %1540 = vmatpush.xpose.msra.mxu0 %v1530
        %1541 = vmatpush.xpose.msra.mxu0 %v1527
        %1542 = vmatpush.xpose.msra.mxu0 %v1524
        %1543 = vmatpush.xpose.msra.mxu0 %v1521
        %1544 = vmatpush.xpose.msra.mxu0 %v1518
        %1545 = vmatpush.xpose.msra.mxu0 %v1515
        %1546 = vmatpush.xpose.msra.mxu0 %v1512
        %1547 = vmatpush.xpose.msra.mxu0 %v1509
        %1548 = vmatmul.f32.gmra.mxu0 %v1497
        %v1549 = vpop.f32.mrf.mxu0
        %v1550 = vadd.f32 0.0, %v1549
        %1551 = vmatmul.f32.gmra.mxu0 %v1500
        %v1552 = vpop.f32.mrf.mxu0
        %v1553 = vadd.f32 0.0, %v1552
        %1554 = vmatmul.f32.gmra.mxu0 %v1503
        %v1555 = vpop.f32.mrf.mxu0
        %v1556 = vadd.f32 0.0, %v1555
        %1557 = vmatmul.f32.gmra.mxu0 %v1506
        %v1558 = vpop.f32.mrf.mxu0
        %v1559 = vadd.f32 0.0, %v1558
        %1560 = vdwg.mxu0
        %s1561 = scalar_lea.vmem %s191, 96 [#allocation5]
        %1562 = vst.msk [vmem:[%s1561] sm:$0xff] %vm469, %v1550
        %1563 = vst.msk [vmem:[%s1561 + $0x8] sm:$0xff] %vm469, %v1553
        %1564 = vst.msk [vmem:[%s1561 + $0x10] sm:$0xff] %vm469, %v1556
        %1565 = vst.msk [vmem:[%s1561 + $0x18] sm:$0xff] %vm469, %v1559
        %s1566 = sand.u32 %s96, 1
        %s1567 = scalar_lea.sflag [#allocation4], %s1566
        %s1568 = sand.u32 %s96, 1
        %s1569 = smul.addr %s1568, 128
        %s1570 = scalar_lea.vmem [#allocation5], %s1569
        // Predicated region
        $region37: #{tpu_custom_call.1} parent=31 // pred_check
          %p1571 = pneg %p106
        $region38: #{tpu_custom_call.1} parent=31 // pred_check_branch
          %1573 = sbr.rel (%p1571) target = $region40
        $region39: #{tpu_custom_call.1} parent=31 // pred_region
          %s1574 = smul.u32 4, %s20
          %1576 = vsyncadd %s1567, 0
          %s1577 = smul.addr %s1574, 4
          %s1578 = smul.addr %s1577, 8
          %s1579 = scalar_lea.hbm %s3, %s1578
          %s1580 = sshll.u32 %s1570, 4
          %s1581 = int_to_ptr.vmem [resolvable:$true] %s1580
          %s1582 = sshll.u32 %s1579, 4
          %s1583 = int_to_ptr.hbm [resolvable:$true] %s1582
          %1588 = dma.vmem_to_hbm [thread:$0]  %s1581, 2048, %s1583, %s1567, 128, 128, 8
        $region40: #{tpu_custom_call.1} parent=31 // pred_fallthru
          _
      $region32: #{tpu_custom_call.1} parent=5 // pred_fallthru
        _
      %p1589 = scmp.le.s32.totalorder 2, %s15
      // Predicated region
      $region41: #{tpu_custom_call.1} parent=5 // pred_check
        %p1590 = pneg %p1589
      $region42: #{tpu_custom_call.1} parent=5 // pred_check_branch
        %1592 = sbr.rel (%p1590) target = $region44
      $region43: #{tpu_custom_call.1} parent=5 // pred_region
        %s1593 = ssub.s32 %s15, 2
        // Predicated region
        $region45: #{tpu_custom_call.1} parent=43 // pred_check
          %p1594 = pneg %p112
        $region46: #{tpu_custom_call.1} parent=43 // pred_check_branch
          %1596 = sbr.rel (%p1594) target = $region48
        $region47: #{tpu_custom_call.1} parent=43 // pred_region
          %s1597 = sand.u32 %s97, 1
          %s1598 = scalar_lea.sflag [#allocation4], %s1597
          %s1599 = sand.u32 %s97, 1
          %s1600 = smul.addr %s1599, 128
          %s1601 = scalar_lea.vmem [#allocation5], %s1600
          %1603 = dma.done %s1598, 2048
        $region48: #{tpu_custom_call.1} parent=43 // pred_fallthru
          _
      $region44: #{tpu_custom_call.1} parent=5 // pred_fallthru
        _
    $region6: #{tpu_custom_call.1} parent=1 // loop_footer
      %s19 = sadd.s32 1, %s15
    $region7: #{tpu_custom_call.1} parent=1 // loop_footer_branch
      %14 = sbr.rel target = $region3
    $region8: #{tpu_custom_call.1} parent=1 // loop_exit
      _
    %1604 = vsyncpa [#allocation3], 1
    %s1605 = scalar_lea.sflag [#allocation3], 1
    %1606 = vsyncpa %s1605, 1
    %1607 = vsyncpa [#allocation4], 1
    %s1608 = scalar_lea.sflag [#allocation4], 1
    %1609 = vsyncpa %s1608, 1

</llo_original>
